<compile_context>
chip_gen: v7x
topology: tpu7x:2x2x1
jax: 0.10.0
libtpu: 0.0.40
codegen_flags: <defaults>
</compile_context>

<pallas_src>
import functools
import math

import jax
import jax.numpy as jnp
from jax.experimental import pallas as pl
from jax.experimental.pallas import tpu as pltpu

D_MODEL = 32
N_HEAD = 4
D_FF = 64
D_K = D_MODEL // N_HEAD
LN_EPS = 1e-5

# Row indices inside the packed (8, D_FF) parameter-vector slab.
_ROW_G1, _ROW_B1, _ROW_G2, _ROW_B2, _ROW_FB2, _ROW_FB1 = 0, 1, 2, 3, 4, 5


def _layernorm(x, gamma, beta):
    # x: (rows, D) f32 ; gamma/beta: (1, D). Biased variance (PyTorch LayerNorm).
    mean = jnp.mean(x, axis=-1, keepdims=True)
    var = jnp.mean((x - mean) * (x - mean), axis=-1, keepdims=True)
    inv = jax.lax.rsqrt(var + LN_EPS)
    return (x - mean) * inv * gamma + beta


def encoder_layer_kernel(
    x_ref,       # (TB*S, D)  f32 activation rows (no in-kernel relayout)
    wqk_ref,     # (D, 2D)    bf16, [Wq | Wk/sqrt(d_k)] pre-transposed
    wo_ref,      # (D, D)     bf16, pre-transposed
    w1_ref,      # (D, D_FF)  bf16
    w2_ref,      # (D_FF, D)  bf16
    vecs_ref,    # (8, D_FF)  f32 packed LN gammas/betas + FFN biases
    o_ref,       # (TB*S, D)
    *, tb, seq,
):
    rows = tb * seq
    x2d = x_ref[...]                                            # f32 (rows, D)

    vecs = vecs_ref[...]
    g1 = vecs[_ROW_G1:_ROW_G1 + 1, :D_MODEL]
    be1 = vecs[_ROW_B1:_ROW_B1 + 1, :D_MODEL]
    g2 = vecs[_ROW_G2:_ROW_G2 + 1, :D_MODEL]
    be2 = vecs[_ROW_B2:_ROW_B2 + 1, :D_MODEL]
    fb2 = vecs[_ROW_FB2:_ROW_FB2 + 1, :D_MODEL]
    fb1 = vecs[_ROW_FB1:_ROW_FB1 + 1, :]

    # ---- Fused Q/K projection: bf16 operands, f32 MXU accumulation. ----
    qk = jnp.dot(x2d.astype(jnp.bfloat16), wqk_ref[...],
                 preferred_element_type=jnp.float32)            # (rows, 2D)
    qk3 = qk.reshape(tb, seq, 2 * D_MODEL)                      # leading-dim split only
    q3 = qk3[:, :, :D_MODEL]                                    # (TB, S, D) f32
    k3 = qk3[:, :, D_MODEL:]                                    # 1/sqrt(d_k) folded into Wk
    # V = W_Q(V) faithful to the PyTorch module (W_V is dead weight) -> V == Q.

    # ---- Per-head attention; head-concat folded into the output projection:
    #      ctx @ Wo == sum_h ctx_h @ Wo[h*dk:(h+1)*dk, :]  (no lane concatenate). ----
    attn = jnp.zeros((rows, D_MODEL), jnp.float32)
    wo = wo_ref[...]
    for h in range(N_HEAD):                                     # static unroll
        lo = h * D_K
        qh = q3[:, :, lo:lo + D_K].astype(jnp.bfloat16)         # (TB, S, d_k)
        kh = k3[:, :, lo:lo + D_K].astype(jnp.bfloat16)
        s = jnp.einsum("bqd,bkd->bqk", qh, kh,
                       preferred_element_type=jnp.float32)      # (TB, S, S) f32
        s = s - jnp.max(s, axis=-1, keepdims=True)
        e = jnp.exp(s)
        p = e * pl.reciprocal(jnp.sum(e, axis=-1, keepdims=True), approx=True)
        ctx_h = jnp.einsum("bqk,bkd->bqd", p.astype(jnp.bfloat16), qh,
                           preferred_element_type=jnp.float32)  # (TB, S, d_k) ; V == Q
        attn = attn + jnp.dot(ctx_h.reshape(rows, D_K).astype(jnp.bfloat16),
                              wo[lo:lo + D_K, :],
                              preferred_element_type=jnp.float32)

    y = _layernorm(attn + x2d, g1, be1)                         # f32

    # ---- Feed-forward network (bf16 matmul operands, f32 elsewhere) ----
    hdn = jnp.dot(y.astype(jnp.bfloat16), w1_ref[...],
                  preferred_element_type=jnp.float32) + fb1
    hdn = jnp.maximum(hdn, 0.0)                                 # ReLU
    z = jnp.dot(hdn.astype(jnp.bfloat16), w2_ref[...],
                preferred_element_type=jnp.float32) + fb2
    out = _layernorm(z + y, g2, be2)

    o_ref[...] = out.astype(o_ref.dtype)


def _pick_tb(B, S, *, target_rows=2048, max_block_bytes=1 << 20):
    """Choose the batch tile TB.

    Constraints / preferences:
      * TB divides B and (TB % 8 == 0 or TB == B)   -> (8,128) block-shape rule.
      * (TB*S, D) f32 x-block <= ~1 MiB             -> with f32 intermediates and
        double-buffered in/out blocks this stays well inside the 32 MiB scoped VMEM
        limit (v7x has only 64 MiB physical VMEM per TensorCore).
      * prefer B // TB >= 2 when the tile still reaches >= target_rows rows, so the
        "parallel" grid axis can be split across v7x's two TensorCores.
    Among the remaining candidates pick the LARGEST tile (amortizes the ~0.35 us
    per-grid-step overhead and makes fatter DMAs / MXU calls).
    """
    max_rows = max(S, max_block_bytes // (4 * D_MODEL))
    valid = [d for d in range(1, B + 1)
             if B % d == 0 and (d % 8 == 0 or d == B) and d * S <= max_rows]
    if not valid:
        # No legal tile fits the budget -> take the smallest legal tile.
        legal = [d for d in range(1, B + 1) if B % d == 0 and (d % 8 == 0 or d == B)]
        return min(legal)
    multi = [d for d in valid if B // d >= 2 and d * S >= target_rows]
    return max(multi) if multi else max(valid)


def _pack_vecs(params):
    """Pack the 6 small per-layer vectors into one (8, D_FF) f32 slab."""
    def row(v):
        v = jnp.asarray(v, jnp.float32).reshape(-1)
        return jnp.pad(v, (0, D_FF - v.shape[0])).reshape(1, D_FF)

    rows = [row(params["gamma1"]), row(params["beta1"]),
            row(params["gamma2"]), row(params["beta2"]),
            row(params["b2"]), row(params["b1"]),
            jnp.zeros((2, D_FF), jnp.float32)]
    return jnp.concatenate(rows, axis=0)                        # (8, D_FF)


def encoder_layer(x, params):
    """x: (B, S, D) float32. params: dict of pre-transposed weights."""
    B, S, D = x.shape
    assert D == D_MODEL
    TB = _pick_tb(B, S)
    assert B % TB == 0
    rows_blk = TB * S

    # Contiguous (free) host-side reshape; the kernel block is (TB*S, D) with
    # last dim == full array dim, so no in-kernel relayout and contiguous DMAs.
    x2 = x.reshape(B * S, D)

    # Fold the 1/sqrt(d_k) score scale into Wk; pre-cast matmul weights to bf16
    # (halves weight DMA bytes; the MXU still accumulates in f32).
    wqk = jnp.concatenate(
        [params["wq_t"], params["wk_t"] * (1.0 / math.sqrt(D_K))], axis=1
    ).astype(jnp.bfloat16)                                      # (D, 2D)
    wo = params["wo_t"].astype(jnp.bfloat16)
    w1 = params["w1_t"].astype(jnp.bfloat16)
    w2 = params["w2_t"].astype(jnp.bfloat16)
    vecs = _pack_vecs(params)

    def full(arr):
        return pl.BlockSpec(arr.shape, lambda b: (0, 0))

    grid_spec = pltpu.PrefetchScalarGridSpec(
        num_scalar_prefetch=0,
        grid=(B // TB,),
        in_specs=[
            pl.BlockSpec((rows_blk, D), lambda b: (b, 0)),      # x rows
            full(wqk), full(wo), full(w1), full(w2), full(vecs),
        ],
        out_specs=pl.BlockSpec((rows_blk, D), lambda b: (b, 0)),
    )
    kernel = functools.partial(encoder_layer_kernel, tb=TB, seq=S)
    out2 = pl.pallas_call(
        kernel,
        out_shape=jax.ShapeDtypeStruct((B * S, D), x.dtype),
        grid_spec=grid_spec,
        compiler_params=pltpu.CompilerParams(
            dimension_semantics=("parallel",),
            # Safe on v5e/v6e/v7x; the 1 MiB block budget keeps usage well below it.
            vmem_limit_bytes=32 * 1024 * 1024,
        ),
    )(x2, wqk, wo, w1, w2, vecs)
    return out2.reshape(B, S, D)


def encoder_layer_ref(x, params):
    """Pure-JAX f32 reference matching the PyTorch forward (eval mode)."""
    B, S, D = x.shape
    q = x @ params["wq_t"]
    k = x @ params["wk_t"]
    v = x @ params["wq_t"]                                      # W_Q applied to V (as in PyTorch code)
    qh = q.reshape(B, S, N_HEAD, D_K).transpose(0, 2, 1, 3)
    kh = k.reshape(B, S, N_HEAD, D_K).transpose(0, 2, 1, 3)
    vh = v.reshape(B, S, N_HEAD, D_K).transpose(0, 2, 1, 3)
    scores = jnp.einsum("bhqd,bhkd->bhqk", qh, kh) / math.sqrt(D_K)
    p = jax.nn.softmax(scores, axis=-1)
    ctx = jnp.einsum("bhqk,bhkd->bhqd", p, vh)
    ctx = ctx.transpose(0, 2, 1, 3).reshape(B, S, D)
    attn_out = ctx @ params["wo_t"]

    def ln(z, g, b):
        m = jnp.mean(z, axis=-1, keepdims=True)
        v_ = jnp.mean((z - m) ** 2, axis=-1, keepdims=True)
        return (z - m) / jnp.sqrt(v_ + LN_EPS) * g + b

    y = ln(attn_out + x, params["gamma1"], params["beta1"])
    h = jnp.maximum(y @ params["w1_t"] + params["b1"], 0.0)
    z = h @ params["w2_t"] + params["b2"]
    return ln(z + y, params["gamma2"], params["beta2"])


def init_params(key):
    ks = jax.random.split(key, 6)
    scale = 0.02
    return {
        # pre-transposed Linear weights: (in_features, out_features)
        "wq_t": jax.random.normal(ks[0], (D_MODEL, D_MODEL), jnp.float32) * scale,
        "wk_t": jax.random.normal(ks[1], (D_MODEL, D_MODEL), jnp.float32) * scale,
        "wo_t": jax.random.normal(ks[2], (D_MODEL, D_MODEL), jnp.float32) * scale,
        "w1_t": jax.random.normal(ks[3], (D_MODEL, D_FF), jnp.float32) * scale,
        "w2_t": jax.random.normal(ks[4], (D_FF, D_MODEL), jnp.float32) * scale,
        "b1": jax.random.normal(ks[5], (1, D_FF), jnp.float32) * scale,
        "b2": jnp.zeros((1, D_MODEL), jnp.float32),
        "gamma1": jnp.ones((1, D_MODEL), jnp.float32),
        "beta1": jnp.zeros((1, D_MODEL), jnp.float32),
        "gamma2": jnp.ones((1, D_MODEL), jnp.float32),
        "beta2": jnp.zeros((1, D_MODEL), jnp.float32),
    }


if __name__ == "__main__":
    key = jax.random.PRNGKey(0)
    kx, kp = jax.random.split(key)
    B, S = 2, 8
    x = jax.random.normal(kx, (B, S, D_MODEL), jnp.float32)
    params = init_params(kp)

    out = encoder_layer(x, params)
    out = jax.block_until_ready(out)

    ref = encoder_layer_ref(x, params)
    assert out.shape == (B, S, D_MODEL)
    # bf16 MXU operands + approx-reciprocal softmax denominator => looser tolerance
    # than the exact-f32 reference (observed error is O(1e-3) on LN-normalized output).
    assert jnp.allclose(out, ref, atol=3e-2, rtol=3e-2), (
        "mismatch vs JAX reference; max abs err = "
        f"{float(jnp.max(jnp.abs(out - ref)))}")
    print("KERNEL_OK")
</pallas_src>

<mosaic_0001>
module attributes {stable_mosaic.version = 11 : i64} {
  func.func @encoder_layer_kernel(%arg0: i32, %arg1: memref<16x32xf32, #tpu.memory_space<vmem>>, %arg2: memref<32x64xbf16, #tpu.memory_space<vmem>>, %arg3: memref<32x32xbf16, #tpu.memory_space<vmem>>, %arg4: memref<32x64xbf16, #tpu.memory_space<vmem>>, %arg5: memref<64x32xbf16, #tpu.memory_space<vmem>>, %arg6: memref<8x64xf32, #tpu.memory_space<vmem>>, %arg7: memref<16x32xf32, #tpu.memory_space<vmem>>) attributes {dimension_semantics = [#tpu.dimension_semantics<parallel>], iteration_bounds = array<i64: 1>, scalar_prefetch = 0 : i64, scratch_operands = 0 : i64, tpu.core_type = #tpu.core_type<tc>, window_params = [{transform_indices = @transform_0, window_bounds = array<i64: 16, 32>}, {pipeline_mode = #tpu.pipeline_mode<synchronous>, transform_indices = @transform_1, window_bounds = array<i64: 32, 64>}, {pipeline_mode = #tpu.pipeline_mode<synchronous>, transform_indices = @transform_2, window_bounds = array<i64: 32, 32>}, {pipeline_mode = #tpu.pipeline_mode<synchronous>, transform_indices = @transform_3, window_bounds = array<i64: 32, 64>}, {pipeline_mode = #tpu.pipeline_mode<synchronous>, transform_indices = @transform_4, window_bounds = array<i64: 64, 32>}, {pipeline_mode = #tpu.pipeline_mode<synchronous>, transform_indices = @transform_5, window_bounds = array<i64: 8, 64>}, {transform_indices = @transform_6, window_bounds = array<i64: 16, 32>}]} {
    %c0 = arith.constant 0 : index
    %c0_0 = arith.constant 0 : index
    %0 = vector.load %arg1[%c0, %c0_0] : memref<16x32xf32, #tpu.memory_space<vmem>>, vector<16x32xf32>
    %c0_1 = arith.constant 0 : index
    %c0_2 = arith.constant 0 : index
    %1 = vector.load %arg6[%c0_1, %c0_2] : memref<8x64xf32, #tpu.memory_space<vmem>>, vector<8x64xf32>
    %2 = vector.extract_strided_slice %1 {offsets = [0, 0], sizes = [1, 32], strides = [1, 1]} : vector<8x64xf32> to vector<1x32xf32>
    %3 = vector.extract_strided_slice %1 {offsets = [1, 0], sizes = [1, 32], strides = [1, 1]} : vector<8x64xf32> to vector<1x32xf32>
    %4 = vector.extract_strided_slice %1 {offsets = [2, 0], sizes = [1, 32], strides = [1, 1]} : vector<8x64xf32> to vector<1x32xf32>
    %5 = vector.extract_strided_slice %1 {offsets = [3, 0], sizes = [1, 32], strides = [1, 1]} : vector<8x64xf32> to vector<1x32xf32>
    %6 = vector.extract_strided_slice %1 {offsets = [4, 0], sizes = [1, 32], strides = [1, 1]} : vector<8x64xf32> to vector<1x32xf32>
    %7 = vector.extract_strided_slice %1 {offsets = [5, 0], sizes = [1, 64], strides = [1, 1]} : vector<8x64xf32> to vector<1x64xf32>
    %8 = arith.truncf %0 : vector<16x32xf32> to vector<16x32xbf16>
    %c0_3 = arith.constant 0 : index
    %c0_4 = arith.constant 0 : index
    %9 = vector.load %arg2[%c0_3, %c0_4] : memref<32x64xbf16, #tpu.memory_space<vmem>>, vector<32x64xbf16>
    %cst = arith.constant dense<0.000000e+00> : vector<16x64xf32>
    %10 = tpu.matmul %8, %9, %cst {dimension_numbers = #tpu.dot_dimension_numbers<[1], [0], [0], [1], [0, 0, 1, 1], [], []>} : vector<16x32xbf16>, vector<32x64xbf16>, vector<16x64xf32> -> vector<16x64xf32>
    %11 = vector.shape_cast %10 : vector<16x64xf32> to vector<2x8x64xf32>
    %12 = vector.extract_strided_slice %11 {offsets = [0, 0, 0], sizes = [2, 8, 32], strides = [1, 1, 1]} : vector<2x8x64xf32> to vector<2x8x32xf32>
    %13 = vector.extract_strided_slice %11 {offsets = [0, 0, 32], sizes = [2, 8, 32], strides = [1, 1, 1]} : vector<2x8x64xf32> to vector<2x8x32xf32>
    %cst_5 = arith.constant 0.000000e+00 : f32
    %14 = vector.broadcast %cst_5 : f32 to vector<16x32xf32>
    %c0_6 = arith.constant 0 : index
    %c0_7 = arith.constant 0 : index
    %15 = vector.load %arg3[%c0_6, %c0_7] : memref<32x32xbf16, #tpu.memory_space<vmem>>, vector<32x32xbf16>
    %16 = vector.extract_strided_slice %12 {offsets = [0, 0, 0], sizes = [2, 8, 8], strides = [1, 1, 1]} : vector<2x8x32xf32> to vector<2x8x8xf32>
    %17 = arith.truncf %16 : vector<2x8x8xf32> to vector<2x8x8xbf16>
    %18 = vector.extract_strided_slice %13 {offsets = [0, 0, 0], sizes = [2, 8, 8], strides = [1, 1, 1]} : vector<2x8x32xf32> to vector<2x8x8xf32>
    %19 = arith.truncf %18 : vector<2x8x8xf32> to vector<2x8x8xbf16>
    "tpu.trace_start"() <{level = 10 : i32, message = "bqd,bkd->bqk"}> : () -> ()
    %cst_8 = arith.constant dense<0.000000e+00> : vector<2x8x8xf32>
    %20 = tpu.matmul %17, %19, %cst_8 {dimension_numbers = #tpu.dot_dimension_numbers<[2], [2], [1], [1], [0, 0, 0, 1, 1, 1], [0], [0]>} : vector<2x8x8xbf16>, vector<2x8x8xbf16>, vector<2x8x8xf32> -> vector<2x8x8xf32>
    "tpu.trace_stop"() : () -> ()
    %cst_9 = arith.constant dense<0xFF800000> : vector<2x8xf32>
    %21 = vector.multi_reduction <maximumf>, %20, %cst_9 [2] : vector<2x8x8xf32> to vector<2x8xf32>
    %22 = vector.shape_cast %21 : vector<2x8xf32> to vector<2x8x1xf32>
    %23 = vector.broadcast %22 : vector<2x8x1xf32> to vector<2x8x8xf32>
    %24 = arith.subf %20, %23 : vector<2x8x8xf32>
    %25 = math.exp %24 : vector<2x8x8xf32>
    %cst_10 = arith.constant dense<0.000000e+00> : vector<2x8xf32>
    %26 = vector.multi_reduction <add>, %25, %cst_10 [2] : vector<2x8x8xf32> to vector<2x8xf32>
    %27 = vector.shape_cast %26 : vector<2x8xf32> to vector<2x8x1xf32>
    %28 = tpu.reciprocal %27 {approx = true} : vector<2x8x1xf32> -> vector<2x8x1xf32>
    %29 = vector.broadcast %28 : vector<2x8x1xf32> to vector<2x8x8xf32>
    %30 = arith.mulf %25, %29 : vector<2x8x8xf32>
    %31 = arith.truncf %30 : vector<2x8x8xf32> to vector<2x8x8xbf16>
    "tpu.trace_start"() <{level = 10 : i32, message = "bqk,bkd->bqd"}> : () -> ()
    %cst_11 = arith.constant dense<0.000000e+00> : vector<2x8x8xf32>
    %32 = tpu.matmul %31, %17, %cst_11 {dimension_numbers = #tpu.dot_dimension_numbers<[2], [1], [1], [2], [0, 0, 0, 1, 1, 2], [0], [0]>} : vector<2x8x8xbf16>, vector<2x8x8xbf16>, vector<2x8x8xf32> -> vector<2x8x8xf32>
    "tpu.trace_stop"() : () -> ()
    %33 = vector.shape_cast %32 : vector<2x8x8xf32> to vector<16x8xf32>
    %34 = arith.truncf %33 : vector<16x8xf32> to vector<16x8xbf16>
    %35 = vector.extract_strided_slice %15 {offsets = [0, 0], sizes = [8, 32], strides = [1, 1]} : vector<32x32xbf16> to vector<8x32xbf16>
    %cst_12 = arith.constant dense<0.000000e+00> : vector<16x32xf32>
    %36 = tpu.matmul %34, %35, %cst_12 {dimension_numbers = #tpu.dot_dimension_numbers<[1], [0], [0], [1], [0, 0, 1, 1], [], []>} : vector<16x8xbf16>, vector<8x32xbf16>, vector<16x32xf32> -> vector<16x32xf32>
    %37 = arith.addf %14, %36 : vector<16x32xf32>
    %38 = vector.extract_strided_slice %12 {offsets = [0, 0, 8], sizes = [2, 8, 8], strides = [1, 1, 1]} : vector<2x8x32xf32> to vector<2x8x8xf32>
    %39 = arith.truncf %38 : vector<2x8x8xf32> to vector<2x8x8xbf16>
    %40 = vector.extract_strided_slice %13 {offsets = [0, 0, 8], sizes = [2, 8, 8], strides = [1, 1, 1]} : vector<2x8x32xf32> to vector<2x8x8xf32>
    %41 = arith.truncf %40 : vector<2x8x8xf32> to vector<2x8x8xbf16>
    "tpu.trace_start"() <{level = 10 : i32, message = "bqd,bkd->bqk"}> : () -> ()
    %cst_13 = arith.constant dense<0.000000e+00> : vector<2x8x8xf32>
    %42 = tpu.matmul %39, %41, %cst_13 {dimension_numbers = #tpu.dot_dimension_numbers<[2], [2], [1], [1], [0, 0, 0, 1, 1, 1], [0], [0]>} : vector<2x8x8xbf16>, vector<2x8x8xbf16>, vector<2x8x8xf32> -> vector<2x8x8xf32>
    "tpu.trace_stop"() : () -> ()
    %cst_14 = arith.constant dense<0xFF800000> : vector<2x8xf32>
    %43 = vector.multi_reduction <maximumf>, %42, %cst_14 [2] : vector<2x8x8xf32> to vector<2x8xf32>
    %44 = vector.shape_cast %43 : vector<2x8xf32> to vector<2x8x1xf32>
    %45 = vector.broadcast %44 : vector<2x8x1xf32> to vector<2x8x8xf32>
    %46 = arith.subf %42, %45 : vector<2x8x8xf32>
    %47 = math.exp %46 : vector<2x8x8xf32>
    %cst_15 = arith.constant dense<0.000000e+00> : vector<2x8xf32>
    %48 = vector.multi_reduction <add>, %47, %cst_15 [2] : vector<2x8x8xf32> to vector<2x8xf32>
    %49 = vector.shape_cast %48 : vector<2x8xf32> to vector<2x8x1xf32>
    %50 = tpu.reciprocal %49 {approx = true} : vector<2x8x1xf32> -> vector<2x8x1xf32>
    %51 = vector.broadcast %50 : vector<2x8x1xf32> to vector<2x8x8xf32>
    %52 = arith.mulf %47, %51 : vector<2x8x8xf32>
    %53 = arith.truncf %52 : vector<2x8x8xf32> to vector<2x8x8xbf16>
    "tpu.trace_start"() <{level = 10 : i32, message = "bqk,bkd->bqd"}> : () -> ()
    %cst_16 = arith.constant dense<0.000000e+00> : vector<2x8x8xf32>
    %54 = tpu.matmul %53, %39, %cst_16 {dimension_numbers = #tpu.dot_dimension_numbers<[2], [1], [1], [2], [0, 0, 0, 1, 1, 2], [0], [0]>} : vector<2x8x8xbf16>, vector<2x8x8xbf16>, vector<2x8x8xf32> -> vector<2x8x8xf32>
    "tpu.trace_stop"() : () -> ()
    %55 = vector.shape_cast %54 : vector<2x8x8xf32> to vector<16x8xf32>
    %56 = arith.truncf %55 : vector<16x8xf32> to vector<16x8xbf16>
    %57 = vector.extract_strided_slice %15 {offsets = [8, 0], sizes = [8, 32], strides = [1, 1]} : vector<32x32xbf16> to vector<8x32xbf16>
    %cst_17 = arith.constant dense<0.000000e+00> : vector<16x32xf32>
    %58 = tpu.matmul %56, %57, %cst_17 {dimension_numbers = #tpu.dot_dimension_numbers<[1], [0], [0], [1], [0, 0, 1, 1], [], []>} : vector<16x8xbf16>, vector<8x32xbf16>, vector<16x32xf32> -> vector<16x32xf32>
    %59 = arith.addf %37, %58 : vector<16x32xf32>
    %60 = vector.extract_strided_slice %12 {offsets = [0, 0, 16], sizes = [2, 8, 8], strides = [1, 1, 1]} : vector<2x8x32xf32> to vector<2x8x8xf32>
    %61 = arith.truncf %60 : vector<2x8x8xf32> to vector<2x8x8xbf16>
    %62 = vector.extract_strided_slice %13 {offsets = [0, 0, 16], sizes = [2, 8, 8], strides = [1, 1, 1]} : vector<2x8x32xf32> to vector<2x8x8xf32>
    %63 = arith.truncf %62 : vector<2x8x8xf32> to vector<2x8x8xbf16>
    "tpu.trace_start"() <{level = 10 : i32, message = "bqd,bkd->bqk"}> : () -> ()
    %cst_18 = arith.constant dense<0.000000e+00> : vector<2x8x8xf32>
    %64 = tpu.matmul %61, %63, %cst_18 {dimension_numbers = #tpu.dot_dimension_numbers<[2], [2], [1], [1], [0, 0, 0, 1, 1, 1], [0], [0]>} : vector<2x8x8xbf16>, vector<2x8x8xbf16>, vector<2x8x8xf32> -> vector<2x8x8xf32>
    "tpu.trace_stop"() : () -> ()
    %cst_19 = arith.constant dense<0xFF800000> : vector<2x8xf32>
    %65 = vector.multi_reduction <maximumf>, %64, %cst_19 [2] : vector<2x8x8xf32> to vector<2x8xf32>
    %66 = vector.shape_cast %65 : vector<2x8xf32> to vector<2x8x1xf32>
    %67 = vector.broadcast %66 : vector<2x8x1xf32> to vector<2x8x8xf32>
    %68 = arith.subf %64, %67 : vector<2x8x8xf32>
    %69 = math.exp %68 : vector<2x8x8xf32>
    %cst_20 = arith.constant dense<0.000000e+00> : vector<2x8xf32>
    %70 = vector.multi_reduction <add>, %69, %cst_20 [2] : vector<2x8x8xf32> to vector<2x8xf32>
    %71 = vector.shape_cast %70 : vector<2x8xf32> to vector<2x8x1xf32>
    %72 = tpu.reciprocal %71 {approx = true} : vector<2x8x1xf32> -> vector<2x8x1xf32>
    %73 = vector.broadcast %72 : vector<2x8x1xf32> to vector<2x8x8xf32>
    %74 = arith.mulf %69, %73 : vector<2x8x8xf32>
    %75 = arith.truncf %74 : vector<2x8x8xf32> to vector<2x8x8xbf16>
    "tpu.trace_start"() <{level = 10 : i32, message = "bqk,bkd->bqd"}> : () -> ()
    %cst_21 = arith.constant dense<0.000000e+00> : vector<2x8x8xf32>
    %76 = tpu.matmul %75, %61, %cst_21 {dimension_numbers = #tpu.dot_dimension_numbers<[2], [1], [1], [2], [0, 0, 0, 1, 1, 2], [0], [0]>} : vector<2x8x8xbf16>, vector<2x8x8xbf16>, vector<2x8x8xf32> -> vector<2x8x8xf32>
    "tpu.trace_stop"() : () -> ()
    %77 = vector.shape_cast %76 : vector<2x8x8xf32> to vector<16x8xf32>
    %78 = arith.truncf %77 : vector<16x8xf32> to vector<16x8xbf16>
    %79 = vector.extract_strided_slice %15 {offsets = [16, 0], sizes = [8, 32], strides = [1, 1]} : vector<32x32xbf16> to vector<8x32xbf16>
    %cst_22 = arith.constant dense<0.000000e+00> : vector<16x32xf32>
    %80 = tpu.matmul %78, %79, %cst_22 {dimension_numbers = #tpu.dot_dimension_numbers<[1], [0], [0], [1], [0, 0, 1, 1], [], []>} : vector<16x8xbf16>, vector<8x32xbf16>, vector<16x32xf32> -> vector<16x32xf32>
    %81 = arith.addf %59, %80 : vector<16x32xf32>
    %82 = vector.extract_strided_slice %12 {offsets = [0, 0, 24], sizes = [2, 8, 8], strides = [1, 1, 1]} : vector<2x8x32xf32> to vector<2x8x8xf32>
    %83 = arith.truncf %82 : vector<2x8x8xf32> to vector<2x8x8xbf16>
    %84 = vector.extract_strided_slice %13 {offsets = [0, 0, 24], sizes = [2, 8, 8], strides = [1, 1, 1]} : vector<2x8x32xf32> to vector<2x8x8xf32>
    %85 = arith.truncf %84 : vector<2x8x8xf32> to vector<2x8x8xbf16>
    "tpu.trace_start"() <{level = 10 : i32, message = "bqd,bkd->bqk"}> : () -> ()
    %cst_23 = arith.constant dense<0.000000e+00> : vector<2x8x8xf32>
    %86 = tpu.matmul %83, %85, %cst_23 {dimension_numbers = #tpu.dot_dimension_numbers<[2], [2], [1], [1], [0, 0, 0, 1, 1, 1], [0], [0]>} : vector<2x8x8xbf16>, vector<2x8x8xbf16>, vector<2x8x8xf32> -> vector<2x8x8xf32>
    "tpu.trace_stop"() : () -> ()
    %cst_24 = arith.constant dense<0xFF800000> : vector<2x8xf32>
    %87 = vector.multi_reduction <maximumf>, %86, %cst_24 [2] : vector<2x8x8xf32> to vector<2x8xf32>
    %88 = vector.shape_cast %87 : vector<2x8xf32> to vector<2x8x1xf32>
    %89 = vector.broadcast %88 : vector<2x8x1xf32> to vector<2x8x8xf32>
    %90 = arith.subf %86, %89 : vector<2x8x8xf32>
    %91 = math.exp %90 : vector<2x8x8xf32>
    %cst_25 = arith.constant dense<0.000000e+00> : vector<2x8xf32>
    %92 = vector.multi_reduction <add>, %91, %cst_25 [2] : vector<2x8x8xf32> to vector<2x8xf32>
    %93 = vector.shape_cast %92 : vector<2x8xf32> to vector<2x8x1xf32>
    %94 = tpu.reciprocal %93 {approx = true} : vector<2x8x1xf32> -> vector<2x8x1xf32>
    %95 = vector.broadcast %94 : vector<2x8x1xf32> to vector<2x8x8xf32>
    %96 = arith.mulf %91, %95 : vector<2x8x8xf32>
    %97 = arith.truncf %96 : vector<2x8x8xf32> to vector<2x8x8xbf16>
    "tpu.trace_start"() <{level = 10 : i32, message = "bqk,bkd->bqd"}> : () -> ()
    %cst_26 = arith.constant dense<0.000000e+00> : vector<2x8x8xf32>
    %98 = tpu.matmul %97, %83, %cst_26 {dimension_numbers = #tpu.dot_dimension_numbers<[2], [1], [1], [2], [0, 0, 0, 1, 1, 2], [0], [0]>} : vector<2x8x8xbf16>, vector<2x8x8xbf16>, vector<2x8x8xf32> -> vector<2x8x8xf32>
    "tpu.trace_stop"() : () -> ()
    %99 = vector.shape_cast %98 : vector<2x8x8xf32> to vector<16x8xf32>
    %100 = arith.truncf %99 : vector<16x8xf32> to vector<16x8xbf16>
    %101 = vector.extract_strided_slice %15 {offsets = [24, 0], sizes = [8, 32], strides = [1, 1]} : vector<32x32xbf16> to vector<8x32xbf16>
    %cst_27 = arith.constant dense<0.000000e+00> : vector<16x32xf32>
    %102 = tpu.matmul %100, %101, %cst_27 {dimension_numbers = #tpu.dot_dimension_numbers<[1], [0], [0], [1], [0, 0, 1, 1], [], []>} : vector<16x8xbf16>, vector<8x32xbf16>, vector<16x32xf32> -> vector<16x32xf32>
    %103 = arith.addf %81, %102 : vector<16x32xf32>
    %104 = arith.addf %103, %0 : vector<16x32xf32>
    %cst_28 = arith.constant dense<0.000000e+00> : vector<16xf32>
    %105 = vector.multi_reduction <add>, %104, %cst_28 [1] : vector<16x32xf32> to vector<16xf32>
    %106 = vector.shape_cast %105 : vector<16xf32> to vector<16x1xf32>
    %cst_29 = arith.constant 3.200000e+01 : f32
    %107 = vector.broadcast %cst_29 : f32 to vector<16x1xf32>
    %108 = arith.divf %106, %107 : vector<16x1xf32>
    %109 = vector.broadcast %108 : vector<16x1xf32> to vector<16x32xf32>
    %110 = arith.subf %104, %109 : vector<16x32xf32>
    %111 = vector.broadcast %108 : vector<16x1xf32> to vector<16x32xf32>
    %112 = arith.subf %104, %111 : vector<16x32xf32>
    %113 = arith.mulf %110, %112 : vector<16x32xf32>
    %cst_30 = arith.constant dense<0.000000e+00> : vector<16xf32>
    %114 = vector.multi_reduction <add>, %113, %cst_30 [1] : vector<16x32xf32> to vector<16xf32>
    %115 = vector.shape_cast %114 : vector<16xf32> to vector<16x1xf32>
    %cst_31 = arith.constant 3.200000e+01 : f32
    %116 = vector.broadcast %cst_31 : f32 to vector<16x1xf32>
    %117 = arith.divf %115, %116 : vector<16x1xf32>
    %cst_32 = arith.constant 9.99999974E-6 : f32
    %118 = vector.broadcast %cst_32 : f32 to vector<16x1xf32>
    %119 = arith.addf %117, %118 : vector<16x1xf32>
    %120 = math.rsqrt %119 : vector<16x1xf32>
    %121 = vector.broadcast %108 : vector<16x1xf32> to vector<16x32xf32>
    %122 = arith.subf %104, %121 : vector<16x32xf32>
    %123 = vector.broadcast %120 : vector<16x1xf32> to vector<16x32xf32>
    %124 = arith.mulf %122, %123 : vector<16x32xf32>
    %125 = vector.broadcast %2 : vector<1x32xf32> to vector<16x32xf32>
    %126 = arith.mulf %124, %125 : vector<16x32xf32>
    %127 = vector.broadcast %3 : vector<1x32xf32> to vector<16x32xf32>
    %128 = arith.addf %126, %127 : vector<16x32xf32>
    %129 = arith.truncf %128 : vector<16x32xf32> to vector<16x32xbf16>
    %c0_33 = arith.constant 0 : index
    %c0_34 = arith.constant 0 : index
    %130 = vector.load %arg4[%c0_33, %c0_34] : memref<32x64xbf16, #tpu.memory_space<vmem>>, vector<32x64xbf16>
    %cst_35 = arith.constant dense<0.000000e+00> : vector<16x64xf32>
    %131 = tpu.matmul %129, %130, %cst_35 {dimension_numbers = #tpu.dot_dimension_numbers<[1], [0], [0], [1], [0, 0, 1, 1], [], []>} : vector<16x32xbf16>, vector<32x64xbf16>, vector<16x64xf32> -> vector<16x64xf32>
    %132 = vector.broadcast %7 : vector<1x64xf32> to vector<16x64xf32>
    %133 = arith.addf %131, %132 : vector<16x64xf32>
    %cst_36 = arith.constant 0.000000e+00 : f32
    %134 = vector.broadcast %cst_36 : f32 to vector<16x64xf32>
    %135 = arith.maximumf %133, %134 : vector<16x64xf32>
    %136 = arith.truncf %135 : vector<16x64xf32> to vector<16x64xbf16>
    %c0_37 = arith.constant 0 : index
    %c0_38 = arith.constant 0 : index
    %137 = vector.load %arg5[%c0_37, %c0_38] : memref<64x32xbf16, #tpu.memory_space<vmem>>, vector<64x32xbf16>
    %cst_39 = arith.constant dense<0.000000e+00> : vector<16x32xf32>
    %138 = tpu.matmul %136, %137, %cst_39 {dimension_numbers = #tpu.dot_dimension_numbers<[1], [0], [0], [1], [0, 0, 1, 1], [], []>} : vector<16x64xbf16>, vector<64x32xbf16>, vector<16x32xf32> -> vector<16x32xf32>
    %139 = vector.broadcast %6 : vector<1x32xf32> to vector<16x32xf32>
    %140 = arith.addf %138, %139 : vector<16x32xf32>
    %141 = arith.addf %140, %128 : vector<16x32xf32>
    %cst_40 = arith.constant dense<0.000000e+00> : vector<16xf32>
    %142 = vector.multi_reduction <add>, %141, %cst_40 [1] : vector<16x32xf32> to vector<16xf32>
    %143 = vector.shape_cast %142 : vector<16xf32> to vector<16x1xf32>
    %cst_41 = arith.constant 3.200000e+01 : f32
    %144 = vector.broadcast %cst_41 : f32 to vector<16x1xf32>
    %145 = arith.divf %143, %144 : vector<16x1xf32>
    %146 = vector.broadcast %145 : vector<16x1xf32> to vector<16x32xf32>
    %147 = arith.subf %141, %146 : vector<16x32xf32>
    %148 = vector.broadcast %145 : vector<16x1xf32> to vector<16x32xf32>
    %149 = arith.subf %141, %148 : vector<16x32xf32>
    %150 = arith.mulf %147, %149 : vector<16x32xf32>
    %cst_42 = arith.constant dense<0.000000e+00> : vector<16xf32>
    %151 = vector.multi_reduction <add>, %150, %cst_42 [1] : vector<16x32xf32> to vector<16xf32>
    %152 = vector.shape_cast %151 : vector<16xf32> to vector<16x1xf32>
    %cst_43 = arith.constant 3.200000e+01 : f32
    %153 = vector.broadcast %cst_43 : f32 to vector<16x1xf32>
    %154 = arith.divf %152, %153 : vector<16x1xf32>
    %cst_44 = arith.constant 9.99999974E-6 : f32
    %155 = vector.broadcast %cst_44 : f32 to vector<16x1xf32>
    %156 = arith.addf %154, %155 : vector<16x1xf32>
    %157 = math.rsqrt %156 : vector<16x1xf32>
    %158 = vector.broadcast %145 : vector<16x1xf32> to vector<16x32xf32>
    %159 = arith.subf %141, %158 : vector<16x32xf32>
    %160 = vector.broadcast %157 : vector<16x1xf32> to vector<16x32xf32>
    %161 = arith.mulf %159, %160 : vector<16x32xf32>
    %162 = vector.broadcast %4 : vector<1x32xf32> to vector<16x32xf32>
    %163 = arith.mulf %161, %162 : vector<16x32xf32>
    %164 = vector.broadcast %5 : vector<1x32xf32> to vector<16x32xf32>
    %165 = arith.addf %163, %164 : vector<16x32xf32>
    %c0_45 = arith.constant 0 : index
    %c0_46 = arith.constant 0 : index
    %166 = vector.load %arg7[%c0_45, %c0_46] : memref<16x32xf32, #tpu.memory_space<vmem>>, vector<16x32xf32>
    tpu.vector_store %arg7[%c0_45, %c0_46], %165 {strides = array<i32>} : memref<16x32xf32, #tpu.memory_space<vmem>>, vector<16x32xf32>,
    return
  }
  func.func @transform_0(%arg0: i32) -> (i32, i32) {
    %c0_i32 = arith.constant 0 : i32
    %c0_i32_0 = arith.constant 0 : i32
    return %arg0, %c0_i32 : i32, i32
  }
  func.func @transform_1(%arg0: i32) -> (i32, i32) {
    %c0_i32 = arith.constant 0 : i32
    %c0_i32_0 = arith.constant 0 : i32
    %c0_i32_1 = arith.constant 0 : i32
    return %c0_i32, %c0_i32_0 : i32, i32
  }
  func.func @transform_2(%arg0: i32) -> (i32, i32) {
    %c0_i32 = arith.constant 0 : i32
    %c0_i32_0 = arith.constant 0 : i32
    %c0_i32_1 = arith.constant 0 : i32
    return %c0_i32, %c0_i32_0 : i32, i32
  }
  func.func @transform_3(%arg0: i32) -> (i32, i32) {
    %c0_i32 = arith.constant 0 : i32
    %c0_i32_0 = arith.constant 0 : i32
    %c0_i32_1 = arith.constant 0 : i32
    return %c0_i32, %c0_i32_0 : i32, i32
  }
  func.func @transform_4(%arg0: i32) -> (i32, i32) {
    %c0_i32 = arith.constant 0 : i32
    %c0_i32_0 = arith.constant 0 : i32
    %c0_i32_1 = arith.constant 0 : i32
    return %c0_i32, %c0_i32_0 : i32, i32
  }
  func.func @transform_5(%arg0: i32) -> (i32, i32) {
    %c0_i32 = arith.constant 0 : i32
    %c0_i32_0 = arith.constant 0 : i32
    %c0_i32_1 = arith.constant 0 : i32
    return %c0_i32, %c0_i32_0 : i32, i32
  }
  func.func @transform_6(%arg0: i32) -> (i32, i32) {
    %c0_i32 = arith.constant 0 : i32
    %c0_i32_0 = arith.constant 0 : i32
    return %arg0, %c0_i32 : i32, i32
  }
}

</mosaic_0001>

<llo_original>
// kernel: tpu_custom_call.1
$region0: #{tpu_custom_call.1}
  #allocation0 [shape = 'u32[]', space=smem, size = 0x4, offset = 0x4, fixed_abs, tag = 'smem constant byte address 0x4 - core index']
  #allocation1 [shape = 'u32[144,128]{1,0:T(1,128)}', space=vmem, size = 0x12000, scoped, tag = 'internal scratch']
  %s0 = inlined_call_operand.vmem [shape: f32[16,32], index: 0, kind: input, shape index: {}]
  %s1 = inlined_call_operand.vmem [shape: bf16[32,64], index: 1, kind: input, shape index: {}]
  %s2 = inlined_call_operand.vmem [shape: bf16[32,32], index: 2, kind: input, shape index: {}]
  %s3 = inlined_call_operand.hbm [shape: bf16[32,64], index: 3, kind: input, shape index: {}]
  %s4 = inlined_call_operand.vmem [shape: bf16[64,32], index: 4, kind: input, shape index: {}]
  %s5 = inlined_call_operand.vmem [shape: f32[8,64], index: 5, kind: input, shape index: {}]
  %s6 = inlined_call_operand.hbm [shape: f32[16,32], index: 6, kind: output, shape index: {}]
  %s7 = sld [smem:[#allocation0]]
  $region38: #{tpu_custom_call.1} parent=0
    _
  %s9 = ssub.s32 1, %s7
  %s10 = scalar_select 0, %s9, %s7
  $region1: #{tpu_custom_call.1} parent=0
    #allocation2 [shape = 'u8[8192]{0}', space=vmem, size = 0x2000, scoped, tag = 'input window, operand 3, single buffered']
    #allocation3 [shape = 's32[1]{0}', space=sflag, size = 0x4, scoped, tag = 'scoped memory for tpu_custom_call.1']
    #allocation4 [shape = 's32[1]{0}', space=sflag, size = 0x4, scoped, tag = 'scoped memory for tpu_custom_call.1']
    #allocation5 [shape = 'u8[8192]{0}', space=vmem, size = 0x2000, scoped, tag = 'output window, operand 0, single buffered']
    %11 = vsyncpa [#allocation3], 0
    %12 = vsyncpa [#allocation4], 0
    // Predicated region
    $region2: #{tpu_custom_call.1} parent=1 // pred_check
      _
    $region3: #{tpu_custom_call.1} parent=1 // pred_check_branch
      %14 = sbr.rel (0) target = $region5
    $region4: #{tpu_custom_call.1} parent=1 // pred_region
      _
    $region5: #{tpu_custom_call.1} parent=1 // pred_fallthru
      _
    // Predicated region
    $region6: #{tpu_custom_call.1} parent=1 // pred_check
      _
    $region7: #{tpu_custom_call.1} parent=1 // pred_check_branch
      %16 = sbr.rel (0) target = $region9
    $region8: #{tpu_custom_call.1} parent=1 // pred_region
      _
    $region9: #{tpu_custom_call.1} parent=1 // pred_fallthru
      _
    // Predicated region
    $region10: #{tpu_custom_call.1} parent=1 // pred_check
      _
    $region11: #{tpu_custom_call.1} parent=1 // pred_check_branch
      %18 = sbr.rel (0) target = $region13
    $region12: #{tpu_custom_call.1} parent=1 // pred_region
      _
    $region13: #{tpu_custom_call.1} parent=1 // pred_fallthru
      _
    // Predicated region
    $region14: #{tpu_custom_call.1} parent=1 // pred_check
      _
    $region15: #{tpu_custom_call.1} parent=1 // pred_check_branch
      %20 = sbr.rel (0) target = $region17
    $region16: #{tpu_custom_call.1} parent=1 // pred_region
      %s22 = ssub.s32 256, 256
      %23 = vsyncadd [#allocation3], %s22
      %s24 = sshll.u32 [#allocation2], 4
      %s25 = int_to_ptr.vmem [resolvable:$true] %s24
      %30 = dma.hbm_to_vmem [thread:$0]  %s3, 256, %s25, [#allocation3], 64, 64, 4
    $region17: #{tpu_custom_call.1} parent=1 // pred_fallthru
      _
    // Predicated region
    $region18: #{tpu_custom_call.1} parent=1 // pred_check
      _
    $region19: #{tpu_custom_call.1} parent=1 // pred_check_branch
      %32 = sbr.rel (0) target = $region21
    $region20: #{tpu_custom_call.1} parent=1 // pred_region
      _
    $region21: #{tpu_custom_call.1} parent=1 // pred_fallthru
      _
    // Predicated region
    $region22: #{tpu_custom_call.1} parent=1 // pred_check
      _
    $region23: #{tpu_custom_call.1} parent=1 // pred_check_branch
      %34 = sbr.rel (0) target = $region25
    $region24: #{tpu_custom_call.1} parent=1 // pred_region
      _
    $region25: #{tpu_custom_call.1} parent=1 // pred_fallthru
      _
    // Predicated region
    $region26: #{tpu_custom_call.1} parent=1 // pred_check
      _
    $region27: #{tpu_custom_call.1} parent=1 // pred_check_branch
      %36 = sbr.rel (0) target = $region29
    $region28: #{tpu_custom_call.1} parent=1 // pred_region
      %37 = dma.done [#allocation3], 256
    $region29: #{tpu_custom_call.1} parent=1 // pred_fallthru
      _
    %v39 = vld [vmem:[%s0] sm:$0xff]
    %v40 = vld [vmem:[%s0 + $0x8] sm:$0xff]
    %v41 = vld [vmem:[%s5] sm:$0xff]
    %v42 = vpack.c.bf16 %v40, %v39
    %v43 = vld [vmem:[%s1] sm:$0xf]
    %v44 = vld [vmem:[%s1 + $0x4] sm:$0xf]
    %v45 = vld [vmem:[%s1 + $0x8] sm:$0xf]
    %v46 = vld [vmem:[%s1 + $0xc] sm:$0xf]
    %v51 = vunpack.c.l.b16 %v43
    %v52 = vunpack.c.l.b16 %v44
    %v53 = vunpack.c.l.b16 %v45
    %v54 = vunpack.c.l.b16 %v46
    %v55 = vpack.c.b16 %v52, %v51
    %v56 = vpack.c.b16 %v54, %v53
    %vm59 = vcmask 261120
    %v61 = vsel %vm59, %v42, 0
    %63 = vmatprep.subr.bf16.mxu0 0
    %64 = vmatpush1.bf16.msra.mxu0 %v55
    %65 = vmatprep.subr.bf16.mxu0 0
    %66 = vmatpush1.bf16.msra.mxu0 %v56
    %67 = vmatprep.subr.bf16.mxu0 0
    %68 = vmatpush1.bf16.msra.mxu0 0
    %69 = vmatprep.subr.bf16.mxu0 0
    %70 = vmatpush1.bf16.msra.mxu0 0
    %71 = vmatprep.subr.bf16.mxu0 0
    %72 = vmatpush1.bf16.msra.mxu0 0
    %73 = vmatprep.subr.bf16.mxu0 0
    %74 = vmatpush1.bf16.msra.mxu0 0
    %75 = vmatprep.subr.bf16.mxu0 0
    %76 = vmatpush1.bf16.msra.mxu0 0
    %77 = vmatprep.subr.bf16.mxu0 0
    %78 = vmatpush1.bf16.msra.mxu0 0
    %79 = vmatprep.subr.bf16.mxu0 0
    %80 = vmatpush1.bf16.msra.mxu0 0
    %81 = vmatprep.subr.bf16.mxu0 0
    %82 = vmatpush1.bf16.msra.mxu0 0
    %83 = vmatprep.subr.bf16.mxu0 0
    %84 = vmatpush1.bf16.msra.mxu0 0
    %85 = vmatprep.subr.bf16.mxu0 0
    %86 = vmatpush1.bf16.msra.mxu0 0
    %87 = vmatprep.subr.bf16.mxu0 0
    %88 = vmatpush1.bf16.msra.mxu0 0
    %89 = vmatprep.subr.bf16.mxu0 0
    %90 = vmatpush1.bf16.msra.mxu0 0
    %91 = vmatprep.subr.bf16.mxu0 0
    %92 = vmatpush1.bf16.msra.mxu0 0
    %93 = vmatprep.subr.bf16.mxu0 0
    %94 = vmatpush1.bf16.msra.mxu0 0
    %95 = vmatprep.mubr.bf16.mxu0 0
    %96 = vmatmul.mubr.bf16.gmra.mrb[0].mxu0 %v61
    %v97 = vpop.f32.mrb[0].mxu0
    %v98 = vadd.f32 0.0, %v97
    %v99 = vpop.f32.mrb[0].mxu0
    %v100 = vpop.f32.mrb[0].mxu0
    %v101 = vadd.f32 0.0, %v100
    %v102 = vpop.f32.mrb[0].mxu0
    %103 = vdwg.mxu0
    %v104 = vld [vmem:[%s2] sm:$0xf]
    %v105 = vld [vmem:[%s2 + $0x4] sm:$0xf]
    %v106 = vld [vmem:[%s2 + $0x8] sm:$0xf]
    %v107 = vld [vmem:[%s2 + $0xc] sm:$0xf]
    %v108 = vpack.c.bf16 %v98, %v98
    %v109 = vpack.c.bf16 %v101, %v101
    %111 = vrot.lane.b32.xlu0 %v108, 96
    %v112 = vpop.permute.xlu0 %111
    %vm113 = vcmask 64512
    %v115 = vsel %vm113, %v108, 0
    %v118 = vsel %vm113, %v112, 0
    %120 = vmatprep.subr.bf16.mxu0 0
    %121 = vmatpush1.bf16.xpose.msra.mxu0 %v118
    %122 = vmatprep.subr.bf16.mxu0 0
    %123 = vmatpush1.bf16.xpose.msra.mxu0 0
    %124 = vmatprep.subr.bf16.mxu0 0
    %125 = vmatpush1.bf16.xpose.msra.mxu0 0
    %126 = vmatprep.subr.bf16.mxu0 0
    %127 = vmatpush1.bf16.xpose.msra.mxu0 0
    %128 = vmatprep.subr.bf16.mxu0 0
    %129 = vmatpush1.bf16.xpose.msra.mxu0 0
    %130 = vmatprep.subr.bf16.mxu0 0
    %131 = vmatpush1.bf16.xpose.msra.mxu0 0
    %132 = vmatprep.subr.bf16.mxu0 0
    %133 = vmatpush1.bf16.xpose.msra.mxu0 0
    %134 = vmatprep.subr.bf16.mxu0 0
    %135 = vmatpush1.bf16.xpose.msra.mxu0 0
    %136 = vmatprep.subr.bf16.mxu0 0
    %137 = vmatpush1.bf16.xpose.msra.mxu0 0
    %138 = vmatprep.subr.bf16.mxu0 0
    %139 = vmatpush1.bf16.xpose.msra.mxu0 0
    %140 = vmatprep.subr.bf16.mxu0 0
    %141 = vmatpush1.bf16.xpose.msra.mxu0 0
    %142 = vmatprep.subr.bf16.mxu0 0
    %143 = vmatpush1.bf16.xpose.msra.mxu0 0
    %144 = vmatprep.subr.bf16.mxu0 0
    %145 = vmatpush1.bf16.xpose.msra.mxu0 0
    %146 = vmatprep.subr.bf16.mxu0 0
    %147 = vmatpush1.bf16.xpose.msra.mxu0 0
    %148 = vmatprep.subr.bf16.mxu0 0
    %149 = vmatpush1.bf16.xpose.msra.mxu0 0
    %150 = vmatprep.subr.bf16.mxu0 0
    %151 = vmatpush1.bf16.xpose.msra.mxu0 0
    %152 = vmatprep.mubr.bf16.mxu0 0
    %153 = vmatmul.mubr.bf16.gmra.mrb[0].mxu0 %v115
    %v154 = vpop.f32.mrb[0].mxu0
    %v155 = vadd.f32 0.0, %v154
    %v156 = vpop.f32.mrb[0].mxu0
    %v157 = vpop.f32.mrb[0].mxu0
    %v158 = vpop.f32.mrb[0].mxu0
    %159 = vdwg.mxu0
    %161 = vrot.lane.b32.xlu0 %v109, 96
    %v162 = vpop.permute.xlu0 %161
    %v164 = vsel %vm113, %v109, 0
    %v167 = vsel %vm113, %v162, 0
    %169 = vmatprep.subr.bf16.mxu0 0
    %170 = vmatpush1.bf16.xpose.msra.mxu0 %v167
    %171 = vmatprep.subr.bf16.mxu0 0
    %172 = vmatpush1.bf16.xpose.msra.mxu0 0
    %173 = vmatprep.subr.bf16.mxu0 0
    %174 = vmatpush1.bf16.xpose.msra.mxu0 0
    %175 = vmatprep.subr.bf16.mxu0 0
    %176 = vmatpush1.bf16.xpose.msra.mxu0 0
    %177 = vmatprep.subr.bf16.mxu0 0
    %178 = vmatpush1.bf16.xpose.msra.mxu0 0
    %179 = vmatprep.subr.bf16.mxu0 0
    %180 = vmatpush1.bf16.xpose.msra.mxu0 0
    %181 = vmatprep.subr.bf16.mxu0 0
    %182 = vmatpush1.bf16.xpose.msra.mxu0 0
    %183 = vmatprep.subr.bf16.mxu0 0
    %184 = vmatpush1.bf16.xpose.msra.mxu0 0
    %185 = vmatprep.subr.bf16.mxu0 0
    %186 = vmatpush1.bf16.xpose.msra.mxu0 0
    %187 = vmatprep.subr.bf16.mxu0 0
    %188 = vmatpush1.bf16.xpose.msra.mxu0 0
    %189 = vmatprep.subr.bf16.mxu0 0
    %190 = vmatpush1.bf16.xpose.msra.mxu0 0
    %191 = vmatprep.subr.bf16.mxu0 0
    %192 = vmatpush1.bf16.xpose.msra.mxu0 0
    %193 = vmatprep.subr.bf16.mxu0 0
    %194 = vmatpush1.bf16.xpose.msra.mxu0 0
    %195 = vmatprep.subr.bf16.mxu0 0
    %196 = vmatpush1.bf16.xpose.msra.mxu0 0
    %197 = vmatprep.subr.bf16.mxu0 0
    %198 = vmatpush1.bf16.xpose.msra.mxu0 0
    %199 = vmatprep.subr.bf16.mxu0 0
    %200 = vmatpush1.bf16.xpose.msra.mxu0 0
    %201 = vmatprep.mubr.bf16.mxu0 0
    %202 = vmatmul.mubr.bf16.gmra.mrb[0].mxu0 %v164
    %v203 = vpop.f32.mrb[0].mxu0
    %v204 = vadd.f32 0.0, %v203
    %v205 = vpop.f32.mrb[0].mxu0
    %v206 = vpop.f32.mrb[0].mxu0
    %v207 = vpop.f32.mrb[0].mxu0
    %208 = vdwg.mxu0
    %v209 = vsel %vm113, %v155, -inf
    %210 = vmax.xlane.f32.xlu0 %v209
    %v211 = vpop.xlane.xlu0 %210
    %v212 = vsel %vm113, %v204, -inf
    %213 = vmax.xlane.f32.xlu0 %v212
    %v214 = vpop.xlane.xlu0 %213
    %v215 = vsub.f32 %v155, %v211
    %v216 = vsub.f32 %v204, %v214
    %v217 = vmul.f32 %v215, 1.442695
    %v218 = vpow.pop %v217
    %v219 = vmul.f32 %v216, 1.442695
    %v220 = vpow.pop %v219
    %v221 = vsel %vm113, %v218, 0.0
    %222 = vadd.xlane.f32.xlu0 %v221
    %v223 = vpop.xlane.xlu0 %222
    %v224 = vsel %vm113, %v220, 0.0
    %225 = vadd.xlane.f32.xlu0 %v224
    %v226 = vpop.xlane.xlu0 %225
    %v227 = vrcp.pop %v223
    %v228 = vrcp.pop %v226
    %v229 = vmul.f32 %v218, %v227
    %v230 = vmul.f32 %v220, %v228
    %v231 = vpack.c.bf16 %v229, %v229
    %v232 = vpack.c.bf16 %v230, %v230
    %v234 = vsel %vm113, %v231, 0
    %vm236 = vcmask 1043456
    %v237 = vsel %vm236, %v108, 0
    %239 = vmatprep.subr.bf16.mxu0 0
    %240 = vmatpush1.bf16.msra.mxu0 %v237
    %241 = vmatprep.subr.bf16.mxu0 0
    %242 = vmatpush1.bf16.msra.mxu0 0
    %243 = vmatprep.subr.bf16.mxu0 0
    %244 = vmatpush1.bf16.msra.mxu0 0
    %245 = vmatprep.subr.bf16.mxu0 0
    %246 = vmatpush1.bf16.msra.mxu0 0
    %247 = vmatprep.subr.bf16.mxu0 0
    %248 = vmatpush1.bf16.msra.mxu0 0
    %249 = vmatprep.subr.bf16.mxu0 0
    %250 = vmatpush1.bf16.msra.mxu0 0
    %251 = vmatprep.subr.bf16.mxu0 0
    %252 = vmatpush1.bf16.msra.mxu0 0
    %253 = vmatprep.subr.bf16.mxu0 0
    %254 = vmatpush1.bf16.msra.mxu0 0
    %255 = vmatprep.subr.bf16.mxu0 0
    %256 = vmatpush1.bf16.msra.mxu0 0
    %257 = vmatprep.subr.bf16.mxu0 0
    %258 = vmatpush1.bf16.msra.mxu0 0
    %259 = vmatprep.subr.bf16.mxu0 0
    %260 = vmatpush1.bf16.msra.mxu0 0
    %261 = vmatprep.subr.bf16.mxu0 0
    %262 = vmatpush1.bf16.msra.mxu0 0
    %263 = vmatprep.subr.bf16.mxu0 0
    %264 = vmatpush1.bf16.msra.mxu0 0
    %265 = vmatprep.subr.bf16.mxu0 0
    %266 = vmatpush1.bf16.msra.mxu0 0
    %267 = vmatprep.subr.bf16.mxu0 0
    %268 = vmatpush1.bf16.msra.mxu0 0
    %269 = vmatprep.subr.bf16.mxu0 0
    %270 = vmatpush1.bf16.msra.mxu0 0
    %271 = vmatprep.mubr.bf16.mxu0 0
    %272 = vmatmul.mubr.bf16.gmra.mrb[0].mxu0 %v234
    %v273 = vpop.f32.mrb[0].mxu0
    %v274 = vadd.f32 0.0, %v273
    %v275 = vpop.f32.mrb[0].mxu0
    %v276 = vpop.f32.mrb[0].mxu0
    %v277 = vpop.f32.mrb[0].mxu0
    %278 = vdwg.mxu0
    %v280 = vsel %vm113, %v232, 0
    %v282 = vsel %vm236, %v109, 0
    %284 = vmatprep.subr.bf16.mxu0 0
    %285 = vmatpush1.bf16.msra.mxu0 %v282
    %286 = vmatprep.subr.bf16.mxu0 0
    %287 = vmatpush1.bf16.msra.mxu0 0
    %288 = vmatprep.subr.bf16.mxu0 0
    %289 = vmatpush1.bf16.msra.mxu0 0
    %290 = vmatprep.subr.bf16.mxu0 0
    %291 = vmatpush1.bf16.msra.mxu0 0
    %292 = vmatprep.subr.bf16.mxu0 0
    %293 = vmatpush1.bf16.msra.mxu0 0
    %294 = vmatprep.subr.bf16.mxu0 0
    %295 = vmatpush1.bf16.msra.mxu0 0
    %296 = vmatprep.subr.bf16.mxu0 0
    %297 = vmatpush1.bf16.msra.mxu0 0
    %298 = vmatprep.subr.bf16.mxu0 0
    %299 = vmatpush1.bf16.msra.mxu0 0
    %300 = vmatprep.subr.bf16.mxu0 0
    %301 = vmatpush1.bf16.msra.mxu0 0
    %302 = vmatprep.subr.bf16.mxu0 0
    %303 = vmatpush1.bf16.msra.mxu0 0
    %304 = vmatprep.subr.bf16.mxu0 0
    %305 = vmatpush1.bf16.msra.mxu0 0
    %306 = vmatprep.subr.bf16.mxu0 0
    %307 = vmatpush1.bf16.msra.mxu0 0
    %308 = vmatprep.subr.bf16.mxu0 0
    %309 = vmatpush1.bf16.msra.mxu0 0
    %310 = vmatprep.subr.bf16.mxu0 0
    %311 = vmatpush1.bf16.msra.mxu0 0
    %312 = vmatprep.subr.bf16.mxu0 0
    %313 = vmatpush1.bf16.msra.mxu0 0
    %314 = vmatprep.subr.bf16.mxu0 0
    %315 = vmatpush1.bf16.msra.mxu0 0
    %316 = vmatprep.mubr.bf16.mxu0 0
    %317 = vmatmul.mubr.bf16.gmra.mrb[0].mxu0 %v280
    %v318 = vpop.f32.mrb[0].mxu0
    %v319 = vadd.f32 0.0, %v318
    %v320 = vpop.f32.mrb[0].mxu0
    %v321 = vpop.f32.mrb[0].mxu0
    %v322 = vpop.f32.mrb[0].mxu0
    %323 = vdwg.mxu0
    %v324 = vpack.c.bf16 %v319, %v274
    %325 = vrot.lane.b32.xlu0 %v108, 120
    %v326 = vpop.permute.xlu0 %325
    %327 = vrot.lane.b32.xlu0 %v108, 88
    %v328 = vpop.permute.xlu0 %327
    %v330 = vsel %vm113, %v326, 0
    %v333 = vsel %vm113, %v328, 0
    %335 = vmatprep.subr.bf16.mxu0 0
    %336 = vmatpush1.bf16.xpose.msra.mxu0 %v333
    %337 = vmatprep.subr.bf16.mxu0 0
    %338 = vmatpush1.bf16.xpose.msra.mxu0 0
    %339 = vmatprep.subr.bf16.mxu0 0
    %340 = vmatpush1.bf16.xpose.msra.mxu0 0
    %341 = vmatprep.subr.bf16.mxu0 0
    %342 = vmatpush1.bf16.xpose.msra.mxu0 0
    %343 = vmatprep.subr.bf16.mxu0 0
    %344 = vmatpush1.bf16.xpose.msra.mxu0 0
    %345 = vmatprep.subr.bf16.mxu0 0
    %346 = vmatpush1.bf16.xpose.msra.mxu0 0
    %347 = vmatprep.subr.bf16.mxu0 0
    %348 = vmatpush1.bf16.xpose.msra.mxu0 0
    %349 = vmatprep.subr.bf16.mxu0 0
    %350 = vmatpush1.bf16.xpose.msra.mxu0 0
    %351 = vmatprep.subr.bf16.mxu0 0
    %352 = vmatpush1.bf16.xpose.msra.mxu0 0
    %353 = vmatprep.subr.bf16.mxu0 0
    %354 = vmatpush1.bf16.xpose.msra.mxu0 0
    %355 = vmatprep.subr.bf16.mxu0 0
    %356 = vmatpush1.bf16.xpose.msra.mxu0 0
    %357 = vmatprep.subr.bf16.mxu0 0
    %358 = vmatpush1.bf16.xpose.msra.mxu0 0
    %359 = vmatprep.subr.bf16.mxu0 0
    %360 = vmatpush1.bf16.xpose.msra.mxu0 0
    %361 = vmatprep.subr.bf16.mxu0 0
    %362 = vmatpush1.bf16.xpose.msra.mxu0 0
    %363 = vmatprep.subr.bf16.mxu0 0
    %364 = vmatpush1.bf16.xpose.msra.mxu0 0
    %365 = vmatprep.subr.bf16.mxu0 0
    %366 = vmatpush1.bf16.xpose.msra.mxu0 0
    %367 = vmatprep.mubr.bf16.mxu0 0
    %368 = vmatmul.mubr.bf16.gmra.mrb[0].mxu0 %v330
    %v369 = vpop.f32.mrb[0].mxu0
    %v370 = vadd.f32 0.0, %v369
    %v371 = vpop.f32.mrb[0].mxu0
    %v372 = vpop.f32.mrb[0].mxu0
    %v373 = vpop.f32.mrb[0].mxu0
    %374 = vdwg.mxu0
    %375 = vrot.lane.b32.xlu0 %v109, 120
    %v376 = vpop.permute.xlu0 %375
    %377 = vrot.lane.b32.xlu0 %v109, 88
    %v378 = vpop.permute.xlu0 %377
    %v380 = vsel %vm113, %v376, 0
    %v383 = vsel %vm113, %v378, 0
    %385 = vmatprep.subr.bf16.mxu0 0
    %386 = vmatpush1.bf16.xpose.msra.mxu0 %v383
    %387 = vmatprep.subr.bf16.mxu0 0
    %388 = vmatpush1.bf16.xpose.msra.mxu0 0
    %389 = vmatprep.subr.bf16.mxu0 0
    %390 = vmatpush1.bf16.xpose.msra.mxu0 0
    %391 = vmatprep.subr.bf16.mxu0 0
    %392 = vmatpush1.bf16.xpose.msra.mxu0 0
    %393 = vmatprep.subr.bf16.mxu0 0
    %394 = vmatpush1.bf16.xpose.msra.mxu0 0
    %395 = vmatprep.subr.bf16.mxu0 0
    %396 = vmatpush1.bf16.xpose.msra.mxu0 0
    %397 = vmatprep.subr.bf16.mxu0 0
    %398 = vmatpush1.bf16.xpose.msra.mxu0 0
    %399 = vmatprep.subr.bf16.mxu0 0
    %400 = vmatpush1.bf16.xpose.msra.mxu0 0
    %401 = vmatprep.subr.bf16.mxu0 0
    %402 = vmatpush1.bf16.xpose.msra.mxu0 0
    %403 = vmatprep.subr.bf16.mxu0 0
    %404 = vmatpush1.bf16.xpose.msra.mxu0 0
    %405 = vmatprep.subr.bf16.mxu0 0
    %406 = vmatpush1.bf16.xpose.msra.mxu0 0
    %407 = vmatprep.subr.bf16.mxu0 0
    %408 = vmatpush1.bf16.xpose.msra.mxu0 0
    %409 = vmatprep.subr.bf16.mxu0 0
    %410 = vmatpush1.bf16.xpose.msra.mxu0 0
    %411 = vmatprep.subr.bf16.mxu0 0
    %412 = vmatpush1.bf16.xpose.msra.mxu0 0
    %413 = vmatprep.subr.bf16.mxu0 0
    %414 = vmatpush1.bf16.xpose.msra.mxu0 0
    %415 = vmatprep.subr.bf16.mxu0 0
    %416 = vmatpush1.bf16.xpose.msra.mxu0 0
    %417 = vmatprep.mubr.bf16.mxu0 0
    %418 = vmatmul.mubr.bf16.gmra.mrb[0].mxu0 %v380
    %v419 = vpop.f32.mrb[0].mxu0
    %v420 = vadd.f32 0.0, %v419
    %v421 = vpop.f32.mrb[0].mxu0
    %v422 = vpop.f32.mrb[0].mxu0
    %v423 = vpop.f32.mrb[0].mxu0
    %424 = vdwg.mxu0
    %v425 = vsel %vm113, %v370, -inf
    %426 = vmax.xlane.f32.xlu0 %v425
    %v427 = vpop.xlane.xlu0 %426
    %v428 = vsel %vm113, %v420, -inf
    %429 = vmax.xlane.f32.xlu0 %v428
    %v430 = vpop.xlane.xlu0 %429
    %v431 = vsub.f32 %v370, %v427
    %v432 = vsub.f32 %v420, %v430
    %v433 = vmul.f32 %v431, 1.442695
    %v434 = vpow.pop %v433
    %v435 = vmul.f32 %v432, 1.442695
    %v436 = vpow.pop %v435
    %v437 = vsel %vm113, %v434, 0.0
    %438 = vadd.xlane.f32.xlu0 %v437
    %v439 = vpop.xlane.xlu0 %438
    %v440 = vsel %vm113, %v436, 0.0
    %441 = vadd.xlane.f32.xlu0 %v440
    %v442 = vpop.xlane.xlu0 %441
    %v443 = vrcp.pop %v439
    %v444 = vrcp.pop %v442
    %v445 = vmul.f32 %v434, %v443
    %v446 = vmul.f32 %v436, %v444
    %v447 = vpack.c.bf16 %v445, %v445
    %v448 = vpack.c.bf16 %v446, %v446
    %v450 = vsel %vm113, %v447, 0
    %v452 = vsel %vm236, %v326, 0
    %454 = vmatprep.subr.bf16.mxu0 0
    %455 = vmatpush1.bf16.msra.mxu0 %v452
    %456 = vmatprep.subr.bf16.mxu0 0
    %457 = vmatpush1.bf16.msra.mxu0 0
    %458 = vmatprep.subr.bf16.mxu0 0
    %459 = vmatpush1.bf16.msra.mxu0 0
    %460 = vmatprep.subr.bf16.mxu0 0
    %461 = vmatpush1.bf16.msra.mxu0 0
    %462 = vmatprep.subr.bf16.mxu0 0
    %463 = vmatpush1.bf16.msra.mxu0 0
    %464 = vmatprep.subr.bf16.mxu0 0
    %465 = vmatpush1.bf16.msra.mxu0 0
    %466 = vmatprep.subr.bf16.mxu0 0
    %467 = vmatpush1.bf16.msra.mxu0 0
    %468 = vmatprep.subr.bf16.mxu0 0
    %469 = vmatpush1.bf16.msra.mxu0 0
    %470 = vmatprep.subr.bf16.mxu0 0
    %471 = vmatpush1.bf16.msra.mxu0 0
    %472 = vmatprep.subr.bf16.mxu0 0
    %473 = vmatpush1.bf16.msra.mxu0 0
    %474 = vmatprep.subr.bf16.mxu0 0
    %475 = vmatpush1.bf16.msra.mxu0 0
    %476 = vmatprep.subr.bf16.mxu0 0
    %477 = vmatpush1.bf16.msra.mxu0 0
    %478 = vmatprep.subr.bf16.mxu0 0
    %479 = vmatpush1.bf16.msra.mxu0 0
    %480 = vmatprep.subr.bf16.mxu0 0
    %481 = vmatpush1.bf16.msra.mxu0 0
    %482 = vmatprep.subr.bf16.mxu0 0
    %483 = vmatpush1.bf16.msra.mxu0 0
    %484 = vmatprep.subr.bf16.mxu0 0
    %485 = vmatpush1.bf16.msra.mxu0 0
    %486 = vmatprep.mubr.bf16.mxu0 0
    %487 = vmatmul.mubr.bf16.gmra.mrb[0].mxu0 %v450
    %v488 = vpop.f32.mrb[0].mxu0
    %v489 = vadd.f32 0.0, %v488
    %v490 = vpop.f32.mrb[0].mxu0
    %v491 = vpop.f32.mrb[0].mxu0
    %v492 = vpop.f32.mrb[0].mxu0
    %493 = vdwg.mxu0
    %v495 = vsel %vm113, %v448, 0
    %v497 = vsel %vm236, %v376, 0
    %499 = vmatprep.subr.bf16.mxu0 0
    %500 = vmatpush1.bf16.msra.mxu0 %v497
    %501 = vmatprep.subr.bf16.mxu0 0
    %502 = vmatpush1.bf16.msra.mxu0 0
    %503 = vmatprep.subr.bf16.mxu0 0
    %504 = vmatpush1.bf16.msra.mxu0 0
    %505 = vmatprep.subr.bf16.mxu0 0
    %506 = vmatpush1.bf16.msra.mxu0 0
    %507 = vmatprep.subr.bf16.mxu0 0
    %508 = vmatpush1.bf16.msra.mxu0 0
    %509 = vmatprep.subr.bf16.mxu0 0
    %510 = vmatpush1.bf16.msra.mxu0 0
    %511 = vmatprep.subr.bf16.mxu0 0
    %512 = vmatpush1.bf16.msra.mxu0 0
    %513 = vmatprep.subr.bf16.mxu0 0
    %514 = vmatpush1.bf16.msra.mxu0 0
    %515 = vmatprep.subr.bf16.mxu0 0
    %516 = vmatpush1.bf16.msra.mxu0 0
    %517 = vmatprep.subr.bf16.mxu0 0
    %518 = vmatpush1.bf16.msra.mxu0 0
    %519 = vmatprep.subr.bf16.mxu0 0
    %520 = vmatpush1.bf16.msra.mxu0 0
    %521 = vmatprep.subr.bf16.mxu0 0
    %522 = vmatpush1.bf16.msra.mxu0 0
    %523 = vmatprep.subr.bf16.mxu0 0
    %524 = vmatpush1.bf16.msra.mxu0 0
    %525 = vmatprep.subr.bf16.mxu0 0
    %526 = vmatpush1.bf16.msra.mxu0 0
    %527 = vmatprep.subr.bf16.mxu0 0
    %528 = vmatpush1.bf16.msra.mxu0 0
    %529 = vmatprep.subr.bf16.mxu0 0
    %530 = vmatpush1.bf16.msra.mxu0 0
    %531 = vmatprep.mubr.bf16.mxu0 0
    %532 = vmatmul.mubr.bf16.gmra.mrb[0].mxu0 %v495
    %v533 = vpop.f32.mrb[0].mxu0
    %v534 = vadd.f32 0.0, %v533
    %v535 = vpop.f32.mrb[0].mxu0
    %v536 = vpop.f32.mrb[0].mxu0
    %v537 = vpop.f32.mrb[0].mxu0
    %538 = vdwg.mxu0
    %v539 = vpack.c.bf16 %v534, %v489
    %v541 = vsel %vm113, %v539, 0
    %v544 = vsel %vm236, %v105, 0
    %546 = vmatprep.subr.bf16.mxu0 0
    %547 = vmatpush1.bf16.msra.mxu0 %v544
    %548 = vmatprep.subr.bf16.mxu0 0
    %549 = vmatpush1.bf16.msra.mxu0 0
    %550 = vmatprep.subr.bf16.mxu0 0
    %551 = vmatpush1.bf16.msra.mxu0 0
    %552 = vmatprep.subr.bf16.mxu0 0
    %553 = vmatpush1.bf16.msra.mxu0 0
    %554 = vmatprep.subr.bf16.mxu0 0
    %555 = vmatpush1.bf16.msra.mxu0 0
    %556 = vmatprep.subr.bf16.mxu0 0
    %557 = vmatpush1.bf16.msra.mxu0 0
    %558 = vmatprep.subr.bf16.mxu0 0
    %559 = vmatpush1.bf16.msra.mxu0 0
    %560 = vmatprep.subr.bf16.mxu0 0
    %561 = vmatpush1.bf16.msra.mxu0 0
    %562 = vmatprep.subr.bf16.mxu0 0
    %563 = vmatpush1.bf16.msra.mxu0 0
    %564 = vmatprep.subr.bf16.mxu0 0
    %565 = vmatpush1.bf16.msra.mxu0 0
    %566 = vmatprep.subr.bf16.mxu0 0
    %567 = vmatpush1.bf16.msra.mxu0 0
    %568 = vmatprep.subr.bf16.mxu0 0
    %569 = vmatpush1.bf16.msra.mxu0 0
    %570 = vmatprep.subr.bf16.mxu0 0
    %571 = vmatpush1.bf16.msra.mxu0 0
    %572 = vmatprep.subr.bf16.mxu0 0
    %573 = vmatpush1.bf16.msra.mxu0 0
    %574 = vmatprep.subr.bf16.mxu0 0
    %575 = vmatpush1.bf16.msra.mxu0 0
    %576 = vmatprep.subr.bf16.mxu0 0
    %577 = vmatpush1.bf16.msra.mxu0 0
    %578 = vmatprep.mubr.bf16.mxu0 0
    %579 = vmatmul.mubr.bf16.gmra.mrb[0].mxu0 %v541
    %v580 = vpop.f32.mrb[0].mxu0
    %v581 = vadd.f32 0.0, %v580
    %v582 = vpop.f32.mrb[0].mxu0
    %v583 = vpop.f32.mrb[0].mxu0
    %v584 = vadd.f32 0.0, %v583
    %v585 = vpop.f32.mrb[0].mxu0
    %586 = vdwg.mxu0
    %v588 = vsel %vm113, %v324, 0
    %v591 = vsel %vm236, %v104, 0
    %593 = vmatprep.subr.bf16.mxu0 0
    %594 = vmatpush1.bf16.msra.mxu0 %v591
    %595 = vmatprep.subr.bf16.mxu0 0
    %596 = vmatpush1.bf16.msra.mxu0 0
    %597 = vmatprep.subr.bf16.mxu0 0
    %598 = vmatpush1.bf16.msra.mxu0 0
    %599 = vmatprep.subr.bf16.mxu0 0
    %600 = vmatpush1.bf16.msra.mxu0 0
    %601 = vmatprep.subr.bf16.mxu0 0
    %602 = vmatpush1.bf16.msra.mxu0 0
    %603 = vmatprep.subr.bf16.mxu0 0
    %604 = vmatpush1.bf16.msra.mxu0 0
    %605 = vmatprep.subr.bf16.mxu0 0
    %606 = vmatpush1.bf16.msra.mxu0 0
    %607 = vmatprep.subr.bf16.mxu0 0
    %608 = vmatpush1.bf16.msra.mxu0 0
    %609 = vmatprep.subr.bf16.mxu0 0
    %610 = vmatpush1.bf16.msra.mxu0 0
    %611 = vmatprep.subr.bf16.mxu0 0
    %612 = vmatpush1.bf16.msra.mxu0 0
    %613 = vmatprep.subr.bf16.mxu0 0
    %614 = vmatpush1.bf16.msra.mxu0 0
    %615 = vmatprep.subr.bf16.mxu0 0
    %616 = vmatpush1.bf16.msra.mxu0 0
    %617 = vmatprep.subr.bf16.mxu0 0
    %618 = vmatpush1.bf16.msra.mxu0 0
    %619 = vmatprep.subr.bf16.mxu0 0
    %620 = vmatpush1.bf16.msra.mxu0 0
    %621 = vmatprep.subr.bf16.mxu0 0
    %622 = vmatpush1.bf16.msra.mxu0 0
    %623 = vmatprep.subr.bf16.mxu0 0
    %624 = vmatpush1.bf16.msra.mxu0 0
    %625 = vmatprep.mubr.bf16.mxu0 0
    %626 = vmatmul.mubr.bf16.gmra.mrb[0].mxu0 %v588
    %v627 = vpop.f32.mrb[0].mxu0
    %v628 = vadd.f32 %v581, %v627
    %v629 = vpop.f32.mrb[0].mxu0
    %v630 = vpop.f32.mrb[0].mxu0
    %v631 = vadd.f32 %v584, %v630
    %v632 = vpop.f32.mrb[0].mxu0
    %633 = vdwg.mxu0
    %634 = vrot.lane.b32.xlu0 %v108, 112
    %v635 = vpop.permute.xlu0 %634
    %636 = vrot.lane.b32.xlu0 %v108, 80
    %v637 = vpop.permute.xlu0 %636
    %v639 = vsel %vm113, %v635, 0
    %v642 = vsel %vm113, %v637, 0
    %644 = vmatprep.subr.bf16.mxu0 0
    %645 = vmatpush1.bf16.xpose.msra.mxu0 %v642
    %646 = vmatprep.subr.bf16.mxu0 0
    %647 = vmatpush1.bf16.xpose.msra.mxu0 0
    %648 = vmatprep.subr.bf16.mxu0 0
    %649 = vmatpush1.bf16.xpose.msra.mxu0 0
    %650 = vmatprep.subr.bf16.mxu0 0
    %651 = vmatpush1.bf16.xpose.msra.mxu0 0
    %652 = vmatprep.subr.bf16.mxu0 0
    %653 = vmatpush1.bf16.xpose.msra.mxu0 0
    %654 = vmatprep.subr.bf16.mxu0 0
    %655 = vmatpush1.bf16.xpose.msra.mxu0 0
    %656 = vmatprep.subr.bf16.mxu0 0
    %657 = vmatpush1.bf16.xpose.msra.mxu0 0
    %658 = vmatprep.subr.bf16.mxu0 0
    %659 = vmatpush1.bf16.xpose.msra.mxu0 0
    %660 = vmatprep.subr.bf16.mxu0 0
    %661 = vmatpush1.bf16.xpose.msra.mxu0 0
    %662 = vmatprep.subr.bf16.mxu0 0
    %663 = vmatpush1.bf16.xpose.msra.mxu0 0
    %664 = vmatprep.subr.bf16.mxu0 0
    %665 = vmatpush1.bf16.xpose.msra.mxu0 0
    %666 = vmatprep.subr.bf16.mxu0 0
    %667 = vmatpush1.bf16.xpose.msra.mxu0 0
    %668 = vmatprep.subr.bf16.mxu0 0
    %669 = vmatpush1.bf16.xpose.msra.mxu0 0
    %670 = vmatprep.subr.bf16.mxu0 0
    %671 = vmatpush1.bf16.xpose.msra.mxu0 0
    %672 = vmatprep.subr.bf16.mxu0 0
    %673 = vmatpush1.bf16.xpose.msra.mxu0 0
    %674 = vmatprep.subr.bf16.mxu0 0
    %675 = vmatpush1.bf16.xpose.msra.mxu0 0
    %676 = vmatprep.mubr.bf16.mxu0 0
    %677 = vmatmul.mubr.bf16.gmra.mrb[0].mxu0 %v639
    %v678 = vpop.f32.mrb[0].mxu0
    %v679 = vadd.f32 0.0, %v678
    %v680 = vpop.f32.mrb[0].mxu0
    %v681 = vpop.f32.mrb[0].mxu0
    %v682 = vpop.f32.mrb[0].mxu0
    %683 = vdwg.mxu0
    %684 = vrot.lane.b32.xlu0 %v109, 112
    %v685 = vpop.permute.xlu0 %684
    %686 = vrot.lane.b32.xlu0 %v109, 80
    %v687 = vpop.permute.xlu0 %686
    %v689 = vsel %vm113, %v685, 0
    %v692 = vsel %vm113, %v687, 0
    %694 = vmatprep.subr.bf16.mxu0 0
    %695 = vmatpush1.bf16.xpose.msra.mxu0 %v692
    %696 = vmatprep.subr.bf16.mxu0 0
    %697 = vmatpush1.bf16.xpose.msra.mxu0 0
    %698 = vmatprep.subr.bf16.mxu0 0
    %699 = vmatpush1.bf16.xpose.msra.mxu0 0
    %700 = vmatprep.subr.bf16.mxu0 0
    %701 = vmatpush1.bf16.xpose.msra.mxu0 0
    %702 = vmatprep.subr.bf16.mxu0 0
    %703 = vmatpush1.bf16.xpose.msra.mxu0 0
    %704 = vmatprep.subr.bf16.mxu0 0
    %705 = vmatpush1.bf16.xpose.msra.mxu0 0
    %706 = vmatprep.subr.bf16.mxu0 0
    %707 = vmatpush1.bf16.xpose.msra.mxu0 0
    %708 = vmatprep.subr.bf16.mxu0 0
    %709 = vmatpush1.bf16.xpose.msra.mxu0 0
    %710 = vmatprep.subr.bf16.mxu0 0
    %711 = vmatpush1.bf16.xpose.msra.mxu0 0
    %712 = vmatprep.subr.bf16.mxu0 0
    %713 = vmatpush1.bf16.xpose.msra.mxu0 0
    %714 = vmatprep.subr.bf16.mxu0 0
    %715 = vmatpush1.bf16.xpose.msra.mxu0 0
    %716 = vmatprep.subr.bf16.mxu0 0
    %717 = vmatpush1.bf16.xpose.msra.mxu0 0
    %718 = vmatprep.subr.bf16.mxu0 0
    %719 = vmatpush1.bf16.xpose.msra.mxu0 0
    %720 = vmatprep.subr.bf16.mxu0 0
    %721 = vmatpush1.bf16.xpose.msra.mxu0 0
    %722 = vmatprep.subr.bf16.mxu0 0
    %723 = vmatpush1.bf16.xpose.msra.mxu0 0
    %724 = vmatprep.subr.bf16.mxu0 0
    %725 = vmatpush1.bf16.xpose.msra.mxu0 0
    %726 = vmatprep.mubr.bf16.mxu0 0
    %727 = vmatmul.mubr.bf16.gmra.mrb[0].mxu0 %v689
    %v728 = vpop.f32.mrb[0].mxu0
    %v729 = vadd.f32 0.0, %v728
    %v730 = vpop.f32.mrb[0].mxu0
    %v731 = vpop.f32.mrb[0].mxu0
    %v732 = vpop.f32.mrb[0].mxu0
    %733 = vdwg.mxu0
    %v734 = vsel %vm113, %v679, -inf
    %735 = vmax.xlane.f32.xlu0 %v734
    %v736 = vpop.xlane.xlu0 %735
    %v737 = vsel %vm113, %v729, -inf
    %738 = vmax.xlane.f32.xlu0 %v737
    %v739 = vpop.xlane.xlu0 %738
    %v740 = vsub.f32 %v679, %v736
    %v741 = vsub.f32 %v729, %v739
    %v742 = vmul.f32 %v740, 1.442695
    %v743 = vpow.pop %v742
    %v744 = vmul.f32 %v741, 1.442695
    %v745 = vpow.pop %v744
    %v746 = vsel %vm113, %v743, 0.0
    %747 = vadd.xlane.f32.xlu0 %v746
    %v748 = vpop.xlane.xlu0 %747
    %v749 = vsel %vm113, %v745, 0.0
    %750 = vadd.xlane.f32.xlu0 %v749
    %v751 = vpop.xlane.xlu0 %750
    %v752 = vrcp.pop %v748
    %v753 = vrcp.pop %v751
    %v754 = vmul.f32 %v743, %v752
    %v755 = vmul.f32 %v745, %v753
    %v756 = vpack.c.bf16 %v754, %v754
    %v757 = vpack.c.bf16 %v755, %v755
    %v759 = vsel %vm113, %v756, 0
    %v761 = vsel %vm236, %v635, 0
    %763 = vmatprep.subr.bf16.mxu0 0
    %764 = vmatpush1.bf16.msra.mxu0 %v761
    %765 = vmatprep.subr.bf16.mxu0 0
    %766 = vmatpush1.bf16.msra.mxu0 0
    %767 = vmatprep.subr.bf16.mxu0 0
    %768 = vmatpush1.bf16.msra.mxu0 0
    %769 = vmatprep.subr.bf16.mxu0 0
    %770 = vmatpush1.bf16.msra.mxu0 0
    %771 = vmatprep.subr.bf16.mxu0 0
    %772 = vmatpush1.bf16.msra.mxu0 0
    %773 = vmatprep.subr.bf16.mxu0 0
    %774 = vmatpush1.bf16.msra.mxu0 0
    %775 = vmatprep.subr.bf16.mxu0 0
    %776 = vmatpush1.bf16.msra.mxu0 0
    %777 = vmatprep.subr.bf16.mxu0 0
    %778 = vmatpush1.bf16.msra.mxu0 0
    %779 = vmatprep.subr.bf16.mxu0 0
    %780 = vmatpush1.bf16.msra.mxu0 0
    %781 = vmatprep.subr.bf16.mxu0 0
    %782 = vmatpush1.bf16.msra.mxu0 0
    %783 = vmatprep.subr.bf16.mxu0 0
    %784 = vmatpush1.bf16.msra.mxu0 0
    %785 = vmatprep.subr.bf16.mxu0 0
    %786 = vmatpush1.bf16.msra.mxu0 0
    %787 = vmatprep.subr.bf16.mxu0 0
    %788 = vmatpush1.bf16.msra.mxu0 0
    %789 = vmatprep.subr.bf16.mxu0 0
    %790 = vmatpush1.bf16.msra.mxu0 0
    %791 = vmatprep.subr.bf16.mxu0 0
    %792 = vmatpush1.bf16.msra.mxu0 0
    %793 = vmatprep.subr.bf16.mxu0 0
    %794 = vmatpush1.bf16.msra.mxu0 0
    %795 = vmatprep.mubr.bf16.mxu0 0
    %796 = vmatmul.mubr.bf16.gmra.mrb[0].mxu0 %v759
    %v797 = vpop.f32.mrb[0].mxu0
    %v798 = vadd.f32 0.0, %v797
    %v799 = vpop.f32.mrb[0].mxu0
    %v800 = vpop.f32.mrb[0].mxu0
    %v801 = vpop.f32.mrb[0].mxu0
    %802 = vdwg.mxu0
    %v804 = vsel %vm113, %v757, 0
    %v806 = vsel %vm236, %v685, 0
    %808 = vmatprep.subr.bf16.mxu0 0
    %809 = vmatpush1.bf16.msra.mxu0 %v806
    %810 = vmatprep.subr.bf16.mxu0 0
    %811 = vmatpush1.bf16.msra.mxu0 0
    %812 = vmatprep.subr.bf16.mxu0 0
    %813 = vmatpush1.bf16.msra.mxu0 0
    %814 = vmatprep.subr.bf16.mxu0 0
    %815 = vmatpush1.bf16.msra.mxu0 0
    %816 = vmatprep.subr.bf16.mxu0 0
    %817 = vmatpush1.bf16.msra.mxu0 0
    %818 = vmatprep.subr.bf16.mxu0 0
    %819 = vmatpush1.bf16.msra.mxu0 0
    %820 = vmatprep.subr.bf16.mxu0 0
    %821 = vmatpush1.bf16.msra.mxu0 0
    %822 = vmatprep.subr.bf16.mxu0 0
    %823 = vmatpush1.bf16.msra.mxu0 0
    %824 = vmatprep.subr.bf16.mxu0 0
    %825 = vmatpush1.bf16.msra.mxu0 0
    %826 = vmatprep.subr.bf16.mxu0 0
    %827 = vmatpush1.bf16.msra.mxu0 0
    %828 = vmatprep.subr.bf16.mxu0 0
    %829 = vmatpush1.bf16.msra.mxu0 0
    %830 = vmatprep.subr.bf16.mxu0 0
    %831 = vmatpush1.bf16.msra.mxu0 0
    %832 = vmatprep.subr.bf16.mxu0 0
    %833 = vmatpush1.bf16.msra.mxu0 0
    %834 = vmatprep.subr.bf16.mxu0 0
    %835 = vmatpush1.bf16.msra.mxu0 0
    %836 = vmatprep.subr.bf16.mxu0 0
    %837 = vmatpush1.bf16.msra.mxu0 0
    %838 = vmatprep.subr.bf16.mxu0 0
    %839 = vmatpush1.bf16.msra.mxu0 0
    %840 = vmatprep.mubr.bf16.mxu0 0
    %841 = vmatmul.mubr.bf16.gmra.mrb[0].mxu0 %v804
    %v842 = vpop.f32.mrb[0].mxu0
    %v843 = vadd.f32 0.0, %v842
    %v844 = vpop.f32.mrb[0].mxu0
    %v845 = vpop.f32.mrb[0].mxu0
    %v846 = vpop.f32.mrb[0].mxu0
    %847 = vdwg.mxu0
    %v848 = vpack.c.bf16 %v843, %v798
    %v850 = vsel %vm113, %v848, 0
    %v853 = vsel %vm236, %v106, 0
    %855 = vmatprep.subr.bf16.mxu0 0
    %856 = vmatpush1.bf16.msra.mxu0 %v853
    %857 = vmatprep.subr.bf16.mxu0 0
    %858 = vmatpush1.bf16.msra.mxu0 0
    %859 = vmatprep.subr.bf16.mxu0 0
    %860 = vmatpush1.bf16.msra.mxu0 0
    %861 = vmatprep.subr.bf16.mxu0 0
    %862 = vmatpush1.bf16.msra.mxu0 0
    %863 = vmatprep.subr.bf16.mxu0 0
    %864 = vmatpush1.bf16.msra.mxu0 0
    %865 = vmatprep.subr.bf16.mxu0 0
    %866 = vmatpush1.bf16.msra.mxu0 0
    %867 = vmatprep.subr.bf16.mxu0 0
    %868 = vmatpush1.bf16.msra.mxu0 0
    %869 = vmatprep.subr.bf16.mxu0 0
    %870 = vmatpush1.bf16.msra.mxu0 0
    %871 = vmatprep.subr.bf16.mxu0 0
    %872 = vmatpush1.bf16.msra.mxu0 0
    %873 = vmatprep.subr.bf16.mxu0 0
    %874 = vmatpush1.bf16.msra.mxu0 0
    %875 = vmatprep.subr.bf16.mxu0 0
    %876 = vmatpush1.bf16.msra.mxu0 0
    %877 = vmatprep.subr.bf16.mxu0 0
    %878 = vmatpush1.bf16.msra.mxu0 0
    %879 = vmatprep.subr.bf16.mxu0 0
    %880 = vmatpush1.bf16.msra.mxu0 0
    %881 = vmatprep.subr.bf16.mxu0 0
    %882 = vmatpush1.bf16.msra.mxu0 0
    %883 = vmatprep.subr.bf16.mxu0 0
    %884 = vmatpush1.bf16.msra.mxu0 0
    %885 = vmatprep.subr.bf16.mxu0 0
    %886 = vmatpush1.bf16.msra.mxu0 0
    %887 = vmatprep.mubr.bf16.mxu0 0
    %888 = vmatmul.mubr.bf16.gmra.mrb[0].mxu0 %v850
    %v889 = vpop.f32.mrb[0].mxu0
    %v890 = vadd.f32 0.0, %v889
    %v891 = vpop.f32.mrb[0].mxu0
    %v892 = vpop.f32.mrb[0].mxu0
    %v893 = vadd.f32 0.0, %v892
    %v894 = vpop.f32.mrb[0].mxu0
    %895 = vdwg.mxu0
    %v896 = vadd.f32 %v628, %v890
    %v897 = vadd.f32 %v631, %v893
    %898 = vrot.lane.b32.xlu0 %v108, 104
    %v899 = vpop.permute.xlu0 %898
    %900 = vrot.lane.b32.xlu0 %v108, 72
    %v901 = vpop.permute.xlu0 %900
    %v903 = vsel %vm113, %v899, 0
    %v906 = vsel %vm113, %v901, 0
    %908 = vmatprep.subr.bf16.mxu0 0
    %909 = vmatpush1.bf16.xpose.msra.mxu0 %v906
    %910 = vmatprep.subr.bf16.mxu0 0
    %911 = vmatpush1.bf16.xpose.msra.mxu0 0
    %912 = vmatprep.subr.bf16.mxu0 0
    %913 = vmatpush1.bf16.xpose.msra.mxu0 0
    %914 = vmatprep.subr.bf16.mxu0 0
    %915 = vmatpush1.bf16.xpose.msra.mxu0 0
    %916 = vmatprep.subr.bf16.mxu0 0
    %917 = vmatpush1.bf16.xpose.msra.mxu0 0
    %918 = vmatprep.subr.bf16.mxu0 0
    %919 = vmatpush1.bf16.xpose.msra.mxu0 0
    %920 = vmatprep.subr.bf16.mxu0 0
    %921 = vmatpush1.bf16.xpose.msra.mxu0 0
    %922 = vmatprep.subr.bf16.mxu0 0
    %923 = vmatpush1.bf16.xpose.msra.mxu0 0
    %924 = vmatprep.subr.bf16.mxu0 0
    %925 = vmatpush1.bf16.xpose.msra.mxu0 0
    %926 = vmatprep.subr.bf16.mxu0 0
    %927 = vmatpush1.bf16.xpose.msra.mxu0 0
    %928 = vmatprep.subr.bf16.mxu0 0
    %929 = vmatpush1.bf16.xpose.msra.mxu0 0
    %930 = vmatprep.subr.bf16.mxu0 0
    %931 = vmatpush1.bf16.xpose.msra.mxu0 0
    %932 = vmatprep.subr.bf16.mxu0 0
    %933 = vmatpush1.bf16.xpose.msra.mxu0 0
    %934 = vmatprep.subr.bf16.mxu0 0
    %935 = vmatpush1.bf16.xpose.msra.mxu0 0
    %936 = vmatprep.subr.bf16.mxu0 0
    %937 = vmatpush1.bf16.xpose.msra.mxu0 0
    %938 = vmatprep.subr.bf16.mxu0 0
    %939 = vmatpush1.bf16.xpose.msra.mxu0 0
    %940 = vmatprep.mubr.bf16.mxu0 0
    %941 = vmatmul.mubr.bf16.gmra.mrb[0].mxu0 %v903
    %v942 = vpop.f32.mrb[0].mxu0
    %v943 = vadd.f32 0.0, %v942
    %v944 = vpop.f32.mrb[0].mxu0
    %v945 = vpop.f32.mrb[0].mxu0
    %v946 = vpop.f32.mrb[0].mxu0
    %947 = vdwg.mxu0
    %948 = vrot.lane.b32.xlu0 %v109, 104
    %v949 = vpop.permute.xlu0 %948
    %950 = vrot.lane.b32.xlu0 %v109, 72
    %v951 = vpop.permute.xlu0 %950
    %v953 = vsel %vm113, %v949, 0
    %v956 = vsel %vm113, %v951, 0
    %958 = vmatprep.subr.bf16.mxu0 0
    %959 = vmatpush1.bf16.xpose.msra.mxu0 %v956
    %960 = vmatprep.subr.bf16.mxu0 0
    %961 = vmatpush1.bf16.xpose.msra.mxu0 0
    %962 = vmatprep.subr.bf16.mxu0 0
    %963 = vmatpush1.bf16.xpose.msra.mxu0 0
    %964 = vmatprep.subr.bf16.mxu0 0
    %965 = vmatpush1.bf16.xpose.msra.mxu0 0
    %966 = vmatprep.subr.bf16.mxu0 0
    %967 = vmatpush1.bf16.xpose.msra.mxu0 0
    %968 = vmatprep.subr.bf16.mxu0 0
    %969 = vmatpush1.bf16.xpose.msra.mxu0 0
    %970 = vmatprep.subr.bf16.mxu0 0
    %971 = vmatpush1.bf16.xpose.msra.mxu0 0
    %972 = vmatprep.subr.bf16.mxu0 0
    %973 = vmatpush1.bf16.xpose.msra.mxu0 0
    %974 = vmatprep.subr.bf16.mxu0 0
    %975 = vmatpush1.bf16.xpose.msra.mxu0 0
    %976 = vmatprep.subr.bf16.mxu0 0
    %977 = vmatpush1.bf16.xpose.msra.mxu0 0
    %978 = vmatprep.subr.bf16.mxu0 0
    %979 = vmatpush1.bf16.xpose.msra.mxu0 0
    %980 = vmatprep.subr.bf16.mxu0 0
    %981 = vmatpush1.bf16.xpose.msra.mxu0 0
    %982 = vmatprep.subr.bf16.mxu0 0
    %983 = vmatpush1.bf16.xpose.msra.mxu0 0
    %984 = vmatprep.subr.bf16.mxu0 0
    %985 = vmatpush1.bf16.xpose.msra.mxu0 0
    %986 = vmatprep.subr.bf16.mxu0 0
    %987 = vmatpush1.bf16.xpose.msra.mxu0 0
    %988 = vmatprep.subr.bf16.mxu0 0
    %989 = vmatpush1.bf16.xpose.msra.mxu0 0
    %990 = vmatprep.mubr.bf16.mxu0 0
    %991 = vmatmul.mubr.bf16.gmra.mrb[0].mxu0 %v953
    %v992 = vpop.f32.mrb[0].mxu0
    %v993 = vadd.f32 0.0, %v992
    %v994 = vpop.f32.mrb[0].mxu0
    %v995 = vpop.f32.mrb[0].mxu0
    %v996 = vpop.f32.mrb[0].mxu0
    %997 = vdwg.mxu0
    %v998 = vsel %vm113, %v943, -inf
    %999 = vmax.xlane.f32.xlu0 %v998
    %v1000 = vpop.xlane.xlu0 %999
    %v1001 = vsel %vm113, %v993, -inf
    %1002 = vmax.xlane.f32.xlu0 %v1001
    %v1003 = vpop.xlane.xlu0 %1002
    %v1004 = vsub.f32 %v943, %v1000
    %v1005 = vsub.f32 %v993, %v1003
    %v1006 = vmul.f32 %v1004, 1.442695
    %v1007 = vpow.pop %v1006
    %v1008 = vmul.f32 %v1005, 1.442695
    %v1009 = vpow.pop %v1008
    %v1010 = vsel %vm113, %v1007, 0.0
    %1011 = vadd.xlane.f32.xlu0 %v1010
    %v1012 = vpop.xlane.xlu0 %1011
    %v1013 = vsel %vm113, %v1009, 0.0
    %1014 = vadd.xlane.f32.xlu0 %v1013
    %v1015 = vpop.xlane.xlu0 %1014
    %v1016 = vrcp.pop %v1012
    %v1017 = vrcp.pop %v1015
    %v1018 = vmul.f32 %v1007, %v1016
    %v1019 = vmul.f32 %v1009, %v1017
    %v1020 = vpack.c.bf16 %v1018, %v1018
    %v1021 = vpack.c.bf16 %v1019, %v1019
    %v1023 = vsel %vm113, %v1020, 0
    %v1025 = vsel %vm236, %v899, 0
    %1027 = vmatprep.subr.bf16.mxu0 0
    %1028 = vmatpush1.bf16.msra.mxu0 %v1025
    %1029 = vmatprep.subr.bf16.mxu0 0
    %1030 = vmatpush1.bf16.msra.mxu0 0
    %1031 = vmatprep.subr.bf16.mxu0 0
    %1032 = vmatpush1.bf16.msra.mxu0 0
    %1033 = vmatprep.subr.bf16.mxu0 0
    %1034 = vmatpush1.bf16.msra.mxu0 0
    %1035 = vmatprep.subr.bf16.mxu0 0
    %1036 = vmatpush1.bf16.msra.mxu0 0
    %1037 = vmatprep.subr.bf16.mxu0 0
    %1038 = vmatpush1.bf16.msra.mxu0 0
    %1039 = vmatprep.subr.bf16.mxu0 0
    %1040 = vmatpush1.bf16.msra.mxu0 0
    %1041 = vmatprep.subr.bf16.mxu0 0
    %1042 = vmatpush1.bf16.msra.mxu0 0
    %1043 = vmatprep.subr.bf16.mxu0 0
    %1044 = vmatpush1.bf16.msra.mxu0 0
    %1045 = vmatprep.subr.bf16.mxu0 0
    %1046 = vmatpush1.bf16.msra.mxu0 0
    %1047 = vmatprep.subr.bf16.mxu0 0
    %1048 = vmatpush1.bf16.msra.mxu0 0
    %1049 = vmatprep.subr.bf16.mxu0 0
    %1050 = vmatpush1.bf16.msra.mxu0 0
    %1051 = vmatprep.subr.bf16.mxu0 0
    %1052 = vmatpush1.bf16.msra.mxu0 0
    %1053 = vmatprep.subr.bf16.mxu0 0
    %1054 = vmatpush1.bf16.msra.mxu0 0
    %1055 = vmatprep.subr.bf16.mxu0 0
    %1056 = vmatpush1.bf16.msra.mxu0 0
    %1057 = vmatprep.subr.bf16.mxu0 0
    %1058 = vmatpush1.bf16.msra.mxu0 0
    %1059 = vmatprep.mubr.bf16.mxu0 0
    %1060 = vmatmul.mubr.bf16.gmra.mrb[0].mxu0 %v1023
    %v1061 = vpop.f32.mrb[0].mxu0
    %v1062 = vadd.f32 0.0, %v1061
    %v1063 = vpop.f32.mrb[0].mxu0
    %v1064 = vpop.f32.mrb[0].mxu0
    %v1065 = vpop.f32.mrb[0].mxu0
    %1066 = vdwg.mxu0
    %v1068 = vsel %vm113, %v1021, 0
    %v1070 = vsel %vm236, %v949, 0
    %1072 = vmatprep.subr.bf16.mxu0 0
    %1073 = vmatpush1.bf16.msra.mxu0 %v1070
    %1074 = vmatprep.subr.bf16.mxu0 0
    %1075 = vmatpush1.bf16.msra.mxu0 0
    %1076 = vmatprep.subr.bf16.mxu0 0
    %1077 = vmatpush1.bf16.msra.mxu0 0
    %1078 = vmatprep.subr.bf16.mxu0 0
    %1079 = vmatpush1.bf16.msra.mxu0 0
    %1080 = vmatprep.subr.bf16.mxu0 0
    %1081 = vmatpush1.bf16.msra.mxu0 0
    %1082 = vmatprep.subr.bf16.mxu0 0
    %1083 = vmatpush1.bf16.msra.mxu0 0
    %1084 = vmatprep.subr.bf16.mxu0 0
    %1085 = vmatpush1.bf16.msra.mxu0 0
    %1086 = vmatprep.subr.bf16.mxu0 0
    %1087 = vmatpush1.bf16.msra.mxu0 0
    %1088 = vmatprep.subr.bf16.mxu0 0
    %1089 = vmatpush1.bf16.msra.mxu0 0
    %1090 = vmatprep.subr.bf16.mxu0 0
    %1091 = vmatpush1.bf16.msra.mxu0 0
    %1092 = vmatprep.subr.bf16.mxu0 0
    %1093 = vmatpush1.bf16.msra.mxu0 0
    %1094 = vmatprep.subr.bf16.mxu0 0
    %1095 = vmatpush1.bf16.msra.mxu0 0
    %1096 = vmatprep.subr.bf16.mxu0 0
    %1097 = vmatpush1.bf16.msra.mxu0 0
    %1098 = vmatprep.subr.bf16.mxu0 0
    %1099 = vmatpush1.bf16.msra.mxu0 0
    %1100 = vmatprep.subr.bf16.mxu0 0
    %1101 = vmatpush1.bf16.msra.mxu0 0
    %1102 = vmatprep.subr.bf16.mxu0 0
    %1103 = vmatpush1.bf16.msra.mxu0 0
    %1104 = vmatprep.mubr.bf16.mxu0 0
    %1105 = vmatmul.mubr.bf16.gmra.mrb[0].mxu0 %v1068
    %v1106 = vpop.f32.mrb[0].mxu0
    %v1107 = vadd.f32 0.0, %v1106
    %v1108 = vpop.f32.mrb[0].mxu0
    %v1109 = vpop.f32.mrb[0].mxu0
    %v1110 = vpop.f32.mrb[0].mxu0
    %1111 = vdwg.mxu0
    %v1112 = vpack.c.bf16 %v1107, %v1062
    %v1114 = vsel %vm113, %v1112, 0
    %v1117 = vsel %vm236, %v107, 0
    %1119 = vmatprep.subr.bf16.mxu0 0
    %1120 = vmatpush1.bf16.msra.mxu0 %v1117
    %1121 = vmatprep.subr.bf16.mxu0 0
    %1122 = vmatpush1.bf16.msra.mxu0 0
    %1123 = vmatprep.subr.bf16.mxu0 0
    %1124 = vmatpush1.bf16.msra.mxu0 0
    %1125 = vmatprep.subr.bf16.mxu0 0
    %1126 = vmatpush1.bf16.msra.mxu0 0
    %1127 = vmatprep.subr.bf16.mxu0 0
    %1128 = vmatpush1.bf16.msra.mxu0 0
    %1129 = vmatprep.subr.bf16.mxu0 0
    %1130 = vmatpush1.bf16.msra.mxu0 0
    %1131 = vmatprep.subr.bf16.mxu0 0
    %1132 = vmatpush1.bf16.msra.mxu0 0
    %1133 = vmatprep.subr.bf16.mxu0 0
    %1134 = vmatpush1.bf16.msra.mxu0 0
    %1135 = vmatprep.subr.bf16.mxu0 0
    %1136 = vmatpush1.bf16.msra.mxu0 0
    %1137 = vmatprep.subr.bf16.mxu0 0
    %1138 = vmatpush1.bf16.msra.mxu0 0
    %1139 = vmatprep.subr.bf16.mxu0 0
    %1140 = vmatpush1.bf16.msra.mxu0 0
    %1141 = vmatprep.subr.bf16.mxu0 0
    %1142 = vmatpush1.bf16.msra.mxu0 0
    %1143 = vmatprep.subr.bf16.mxu0 0
    %1144 = vmatpush1.bf16.msra.mxu0 0
    %1145 = vmatprep.subr.bf16.mxu0 0
    %1146 = vmatpush1.bf16.msra.mxu0 0
    %1147 = vmatprep.subr.bf16.mxu0 0
    %1148 = vmatpush1.bf16.msra.mxu0 0
    %1149 = vmatprep.subr.bf16.mxu0 0
    %1150 = vmatpush1.bf16.msra.mxu0 0
    %1151 = vmatprep.mubr.bf16.mxu0 0
    %1152 = vmatmul.mubr.bf16.gmra.mrb[0].mxu0 %v1114
    %v1153 = vpop.f32.mrb[0].mxu0
    %v1154 = vadd.f32 0.0, %v1153
    %v1155 = vpop.f32.mrb[0].mxu0
    %v1156 = vpop.f32.mrb[0].mxu0
    %v1157 = vadd.f32 0.0, %v1156
    %v1158 = vpop.f32.mrb[0].mxu0
    %1159 = vdwg.mxu0
    %v1160 = vadd.f32 %v896, %v1154
    %v1161 = vadd.f32 %v897, %v1157
    %v1162 = vadd.f32 %v1160, %v39
    %v1163 = vadd.f32 %v1161, %v40
    %v1164 = vsel %vm59, %v1162, 0.0
    %1165 = vadd.xlane.f32.xlu0 %v1164
    %v1166 = vpop.xlane.xlu0 %1165
    %v1167 = vsel %vm59, %v1163, 0.0
    %1168 = vadd.xlane.f32.xlu0 %v1167
    %v1169 = vpop.xlane.xlu0 %1168
    %v1170 = vrcp.pop 32.0
    %v1171 = vmul.f32 %v1166, %v1170
    %v1172 = vmul.f32 %v1169, %v1170
    %v1173 = vsub.f32 %v1162, %v1171
    %v1174 = vsub.f32 %v1163, %v1172
    %v1175 = vmul.f32 %v1173, %v1173
    %v1176 = vmul.f32 %v1174, %v1174
    %v1177 = vsel %vm59, %v1175, 0.0
    %1178 = vadd.xlane.f32.xlu0 %v1177
    %v1179 = vpop.xlane.xlu0 %1178
    %v1180 = vsel %vm59, %v1176, 0.0
    %1181 = vadd.xlane.f32.xlu0 %v1180
    %v1182 = vpop.xlane.xlu0 %1181
    %v1183 = vmul.f32 %v1179, %v1170
    %v1184 = vmul.f32 %v1182, %v1170
    %v1185 = vadd.f32 %v1183, 1e-05
    %v1186 = vadd.f32 %v1184, 1e-05
    %v1187 = vrsqrt.pop %v1185
    %v1188 = vrsqrt.pop %v1186
    %v1189 = vmul.f32 %v1173, %v1187
    %v1190 = vmul.f32 %v1174, %v1188
    %v1191 = vlaneseq
    %v1192 = vshrl.u32 %v1191, 7
    %v1193 = vsub.s32 0, %v1192
    %v1194 = vrot.slane %v41, %v1193
    %v1195 = vmul.f32 %v1189, %v1194
    %v1196 = vmul.f32 %v1190, %v1194
    %v1197 = vlaneseq
    %v1198 = vshrl.u32 %v1197, 7
    %v1199 = vsub.s32 1, %v1198
    %v1200 = vrot.slane %v41, %v1199
    %v1201 = vadd.f32 %v1195, %v1200
    %v1202 = vadd.f32 %v1196, %v1200
    %v1203 = vpack.c.bf16 %v1202, %v1201
    %v1204 = vld [vmem:[#allocation2] sm:$0xf]
    %v1205 = vld [vmem:[#allocation2 + $0x4] sm:$0xf]
    %v1206 = vld [vmem:[#allocation2 + $0x8] sm:$0xf]
    %v1207 = vld [vmem:[#allocation2 + $0xc] sm:$0xf]
    %v1208 = vlaneseq
    %v1209 = vshrl.u32 %v1208, 7
    %v1210 = vsub.s32 5, %v1209
    %v1211 = vrot.slane %v41, %v1210
    %v1216 = vunpack.c.l.b16 %v1204
    %v1217 = vunpack.c.l.b16 %v1205
    %v1218 = vunpack.c.l.b16 %v1206
    %v1219 = vunpack.c.l.b16 %v1207
    %v1220 = vpack.c.b16 %v1217, %v1216
    %v1221 = vpack.c.b16 %v1219, %v1218
    %v1225 = vsel %vm59, %v1203, 0
    %1227 = vmatprep.subr.bf16.mxu0 0
    %1228 = vmatpush1.bf16.msra.mxu0 %v1220
    %1229 = vmatprep.subr.bf16.mxu0 0
    %1230 = vmatpush1.bf16.msra.mxu0 %v1221
    %1231 = vmatprep.subr.bf16.mxu0 0
    %1232 = vmatpush1.bf16.msra.mxu0 0
    %1233 = vmatprep.subr.bf16.mxu0 0
    %1234 = vmatpush1.bf16.msra.mxu0 0
    %1235 = vmatprep.subr.bf16.mxu0 0
    %1236 = vmatpush1.bf16.msra.mxu0 0
    %1237 = vmatprep.subr.bf16.mxu0 0
    %1238 = vmatpush1.bf16.msra.mxu0 0
    %1239 = vmatprep.subr.bf16.mxu0 0
    %1240 = vmatpush1.bf16.msra.mxu0 0
    %1241 = vmatprep.subr.bf16.mxu0 0
    %1242 = vmatpush1.bf16.msra.mxu0 0
    %1243 = vmatprep.subr.bf16.mxu0 0
    %1244 = vmatpush1.bf16.msra.mxu0 0
    %1245 = vmatprep.subr.bf16.mxu0 0
    %1246 = vmatpush1.bf16.msra.mxu0 0
    %1247 = vmatprep.subr.bf16.mxu0 0
    %1248 = vmatpush1.bf16.msra.mxu0 0
    %1249 = vmatprep.subr.bf16.mxu0 0
    %1250 = vmatpush1.bf16.msra.mxu0 0
    %1251 = vmatprep.subr.bf16.mxu0 0
    %1252 = vmatpush1.bf16.msra.mxu0 0
    %1253 = vmatprep.subr.bf16.mxu0 0
    %1254 = vmatpush1.bf16.msra.mxu0 0
    %1255 = vmatprep.subr.bf16.mxu0 0
    %1256 = vmatpush1.bf16.msra.mxu0 0
    %1257 = vmatprep.subr.bf16.mxu0 0
    %1258 = vmatpush1.bf16.msra.mxu0 0
    %1259 = vmatprep.mubr.bf16.mxu0 0
    %1260 = vmatmul.mubr.bf16.gmra.mrb[0].mxu0 %v1225
    %v1261 = vpop.f32.mrb[0].mxu0
    %v1262 = vadd.f32 %v1211, %v1261
    %v1263 = vpop.f32.mrb[0].mxu0
    %v1264 = vpop.f32.mrb[0].mxu0
    %v1265 = vadd.f32 %v1211, %v1264
    %v1266 = vpop.f32.mrb[0].mxu0
    %1267 = vdwg.mxu0
    %v1268 = vmax.f32 %v1262, 0.0
    %v1269 = vmax.f32 %v1265, 0.0
    %v1270 = vpack.c.bf16 %v1269, %v1268
    %v1271 = vld [vmem:[%s4] sm:$0xf]
    %v1272 = vld [vmem:[%s4 + $0x4] sm:$0xf]
    %v1273 = vld [vmem:[%s4 + $0x8] sm:$0xf]
    %v1274 = vld [vmem:[%s4 + $0xc] sm:$0xf]
    %v1275 = vld [vmem:[%s4 + $0x10] sm:$0xf]
    %v1276 = vld [vmem:[%s4 + $0x14] sm:$0xf]
    %v1277 = vld [vmem:[%s4 + $0x18] sm:$0xf]
    %v1278 = vld [vmem:[%s4 + $0x1c] sm:$0xf]
    %v1279 = vlaneseq
    %v1280 = vshrl.u32 %v1279, 7
    %v1281 = vsub.s32 4, %v1280
    %v1282 = vrot.slane %v41, %v1281
    %v1291 = vunpack.c.l.b16 %v1271
    %v1292 = vunpack.c.l.b16 %v1272
    %v1293 = vunpack.c.l.b16 %v1273
    %v1294 = vunpack.c.l.b16 %v1274
    %v1295 = vunpack.c.l.b16 %v1275
    %v1296 = vunpack.c.l.b16 %v1276
    %v1297 = vunpack.c.l.b16 %v1277
    %v1298 = vunpack.c.l.b16 %v1278
    %v1299 = vpack.c.b16 %v1292, %v1291
    %v1300 = vpack.c.b16 %v1294, %v1293
    %v1301 = vpack.c.b16 %v1296, %v1295
    %v1302 = vpack.c.b16 %v1298, %v1297
    %vm1307 = vcmask 523264
    %v1309 = vsel %vm1307, %v1270, 0
    %1311 = vmatprep.subr.bf16.mxu0 0
    %1312 = vmatpush1.bf16.msra.mxu0 %v1299
    %1313 = vmatprep.subr.bf16.mxu0 0
    %1314 = vmatpush1.bf16.msra.mxu0 %v1300
    %1315 = vmatprep.subr.bf16.mxu0 0
    %1316 = vmatpush1.bf16.msra.mxu0 %v1301
    %1317 = vmatprep.subr.bf16.mxu0 0
    %1318 = vmatpush1.bf16.msra.mxu0 %v1302
    %1319 = vmatprep.subr.bf16.mxu0 0
    %1320 = vmatpush1.bf16.msra.mxu0 0
    %1321 = vmatprep.subr.bf16.mxu0 0
    %1322 = vmatpush1.bf16.msra.mxu0 0
    %1323 = vmatprep.subr.bf16.mxu0 0
    %1324 = vmatpush1.bf16.msra.mxu0 0
    %1325 = vmatprep.subr.bf16.mxu0 0
    %1326 = vmatpush1.bf16.msra.mxu0 0
    %1327 = vmatprep.subr.bf16.mxu0 0
    %1328 = vmatpush1.bf16.msra.mxu0 0
    %1329 = vmatprep.subr.bf16.mxu0 0
    %1330 = vmatpush1.bf16.msra.mxu0 0
    %1331 = vmatprep.subr.bf16.mxu0 0
    %1332 = vmatpush1.bf16.msra.mxu0 0
    %1333 = vmatprep.subr.bf16.mxu0 0
    %1334 = vmatpush1.bf16.msra.mxu0 0
    %1335 = vmatprep.subr.bf16.mxu0 0
    %1336 = vmatpush1.bf16.msra.mxu0 0
    %1337 = vmatprep.subr.bf16.mxu0 0
    %1338 = vmatpush1.bf16.msra.mxu0 0
    %1339 = vmatprep.subr.bf16.mxu0 0
    %1340 = vmatpush1.bf16.msra.mxu0 0
    %1341 = vmatprep.subr.bf16.mxu0 0
    %1342 = vmatpush1.bf16.msra.mxu0 0
    %1343 = vmatprep.mubr.bf16.mxu0 0
    %1344 = vmatmul.mubr.bf16.gmra.mrb[0].mxu0 %v1309
    %v1345 = vpop.f32.mrb[0].mxu0
    %v1346 = vadd.f32 %v1282, %v1345
    %v1347 = vpop.f32.mrb[0].mxu0
    %v1348 = vpop.f32.mrb[0].mxu0
    %v1349 = vadd.f32 %v1282, %v1348
    %v1350 = vpop.f32.mrb[0].mxu0
    %1351 = vdwg.mxu0
    %v1352 = vadd.f32 %v1346, %v1201
    %v1353 = vadd.f32 %v1349, %v1202
    %v1354 = vsel %vm59, %v1352, 0.0
    %1355 = vadd.xlane.f32.xlu0 %v1354
    %v1356 = vpop.xlane.xlu0 %1355
    %v1357 = vsel %vm59, %v1353, 0.0
    %1358 = vadd.xlane.f32.xlu0 %v1357
    %v1359 = vpop.xlane.xlu0 %1358
    %v1360 = vmul.f32 %v1356, %v1170
    %v1361 = vmul.f32 %v1359, %v1170
    %v1362 = vsub.f32 %v1352, %v1360
    %v1363 = vsub.f32 %v1353, %v1361
    %v1364 = vmul.f32 %v1362, %v1362
    %v1365 = vmul.f32 %v1363, %v1363
    %v1366 = vsel %vm59, %v1364, 0.0
    %1367 = vadd.xlane.f32.xlu0 %v1366
    %v1368 = vpop.xlane.xlu0 %1367
    %v1369 = vsel %vm59, %v1365, 0.0
    %1370 = vadd.xlane.f32.xlu0 %v1369
    %v1371 = vpop.xlane.xlu0 %1370
    %v1372 = vmul.f32 %v1368, %v1170
    %v1373 = vmul.f32 %v1371, %v1170
    %v1374 = vadd.f32 %v1372, 1e-05
    %v1375 = vadd.f32 %v1373, 1e-05
    %v1376 = vrsqrt.pop %v1374
    %v1377 = vrsqrt.pop %v1375
    %v1378 = vmul.f32 %v1362, %v1376
    %v1379 = vmul.f32 %v1363, %v1377
    %v1380 = vlaneseq
    %v1381 = vshrl.u32 %v1380, 7
    %v1382 = vsub.s32 2, %v1381
    %v1383 = vrot.slane %v41, %v1382
    %v1384 = vmul.f32 %v1378, %v1383
    %v1385 = vmul.f32 %v1379, %v1383
    %v1386 = vlaneseq
    %v1387 = vshrl.u32 %v1386, 7
    %v1388 = vsub.s32 3, %v1387
    %v1389 = vrot.slane %v41, %v1388
    %v1390 = vadd.f32 %v1384, %v1389
    %v1391 = vadd.f32 %v1385, %v1389
    %1392 = vst.msk [vmem:[#allocation5] sm:$0xff] %vm59, %v1390
    %1393 = vst.msk [vmem:[#allocation5 + $0x8] sm:$0xff] %vm59, %v1391
    // Predicated region
    $region30: #{tpu_custom_call.1} parent=1 // pred_check
      _
    $region31: #{tpu_custom_call.1} parent=1 // pred_check_branch
      %1395 = sbr.rel (0) target = $region33
    $region32: #{tpu_custom_call.1} parent=1 // pred_region
      %s1397 = ssub.s32 256, 256
      %1398 = vsyncadd [#allocation4], %s1397
      %s1399 = sshll.u32 [#allocation5], 4
      %s1400 = int_to_ptr.vmem [resolvable:$true] %s1399
      %1405 = dma.vmem_to_hbm [thread:$0]  %s1400, 256, %s6, [#allocation4], 128, 128, 8
    $region33: #{tpu_custom_call.1} parent=1 // pred_fallthru
      _
    // Predicated region
    $region34: #{tpu_custom_call.1} parent=1 // pred_check
      _
    $region35: #{tpu_custom_call.1} parent=1 // pred_check_branch
      %1407 = sbr.rel (0) target = $region37
    $region36: #{tpu_custom_call.1} parent=1 // pred_region
      %1408 = dma.done [#allocation4], 256
    $region37: #{tpu_custom_call.1} parent=1 // pred_fallthru
      _
    %1409 = vsyncpa [#allocation3], 1
    %1410 = vsyncpa [#allocation4], 1

</llo_original>
